<compile_context>
chip_gen: v5e
topology: v5e:2x2
jax: 0.10.0
libtpu: 0.0.40
codegen_flags: <defaults>
</compile_context>

<pallas_src>
import functools
import inspect

import jax
import jax.numpy as jnp
import numpy as np
from jax.experimental import pallas as pl
from jax.experimental.pallas import tpu as pltpu


_HAS_BUFFERED = (
    hasattr(pl, "Buffered")
    and "pipeline_mode" in inspect.signature(pl.BlockSpec).parameters
)


def _invariant_spec(shape):
    """BlockSpec for grid-invariant (weight) inputs: constant index map and,
    when supported, a single VMEM buffer (DMA'd exactly once)."""
    idx = lambda i: (0,) * len(shape)
    if _HAS_BUFFERED:
        return pl.BlockSpec(shape, idx, pipeline_mode=pl.Buffered(1))
    return pl.BlockSpec(shape, idx)


# --------------------------------------------------------------------------- #
# In-kernel helpers
# --------------------------------------------------------------------------- #
def _select_mask(x):
    """Weight-token similarity mask (remove_cls + get_featmap_for_select).

    Kept as an f32 element-wise VPU reduction (NOT an MXU dot) so the 0.5
    sigmoid threshold matches the reference reduction order exactly."""
    wt = x[:, 0:1, :]                                    # (Bb, 1, C)
    xb = x[:, 1:, :]                                     # (Bb, N-1, C)
    mw = jnp.sum(xb * wt, axis=-1, keepdims=True)        # (Bb, N-1, 1)
    prob = jax.nn.sigmoid(mw)
    mask = (prob > 0.5).astype(jnp.float32)
    cnt = jnp.sum(mask, axis=1, keepdims=True)           # (Bb, 1, 1)
    mask = jnp.where(cnt == 0.0, jnp.ones_like(mask), mask)
    return wt, xb, mw, prob, mask


def _store_mask_prob(mp_ref, mask, prob):
    """Pack mask / mask_prob lane-dense as (Bb, 2, N-1): spatial tokens on the
    lane axis (unmasked vst), one output slab per grid step."""
    mp_ref[...] = jnp.concatenate(
        [jnp.swapaxes(mask, 1, 2), jnp.swapaxes(prob, 1, 2)], axis=1)


def _project(x3, w, out_dtype=jnp.bfloat16):
    """Lane-dense projection: per-batch (M, C) @ (C, F) MXU matmuls (bf16
    operands, f32 accumulation).  No weight replication across the batch and
    no sublane-unaligned reshape of x."""
    rows = [jnp.dot(x3[b], w, preferred_element_type=jnp.float32)[None]
            for b in range(x3.shape[0])]
    return jnp.concatenate(rows, axis=0).astype(out_dtype)


def _split_heads(t, num_heads):
    """(Bb, M, C) -> (H*Bb, M, d) with z = h*Bb + b.

    Per-head lane slices + leading-axis concat; this relayout is the intrinsic
    cost of the head split (done once per tensor, not per replicated copy)."""
    Bb, M, C = t.shape
    d = C // num_heads
    return jnp.concatenate(
        [t[:, :, h * d:(h + 1) * d] for h in range(num_heads)], axis=0)


def _merge_heads(o_h, num_heads):
    """(H*Bb, N, d) -> (Bb, N, C): lane-concatenate heads back into channels
    (head-major), so the head reduction fuses into the following proj matmul's
    K dimension."""
    Z, N, d = o_h.shape
    Bb = Z // num_heads
    o4 = o_h.reshape(num_heads, Bb, N, d)
    return jnp.concatenate([o4[h] for h in range(num_heads)], axis=-1)


def _attention_heads(q3, k3, v3, num_heads):
    """softmax(q k^T) v batched over (head * batch).  qk scale is pre-folded
    into the q weights; operands bf16, softmax math f32."""
    q_h = _split_heads(q3, num_heads)                    # (Z, N, d)
    k_h = _split_heads(k3, num_heads)                    # (Z, M, d)
    v_h = _split_heads(v3, num_heads)                    # (Z, M, d)
    s = jnp.einsum("znd,zmd->znm", q_h, k_h,
                   preferred_element_type=jnp.float32)   # (Z, N, M)
    s = s - jnp.max(s, axis=-1, keepdims=True)
    p = jnp.exp(s)
    p = p * pl.reciprocal(jnp.sum(p, axis=-1, keepdims=True), approx=True)
    o_h = jnp.einsum("znm,zmd->znd", p.astype(jnp.bfloat16), v_h,
                     preferred_element_type=jnp.float32) # (Z, N, d)
    return _merge_heads(o_h.astype(jnp.bfloat16), num_heads)


# --------------------------------------------------------------------------- #
# Kernels (one per sr_ratio branch; each grid step handles Bb batches)
# --------------------------------------------------------------------------- #
def _attention_full_kernel(x_ref, qw_ref, kw_ref, vw_ref, pw_ref, pb_ref,
                           out_ref, mp_ref, *, num_heads):
    x = x_ref[...]                                       # (Bb, N, C) f32
    _, _, _, prob, mask = _select_mask(x)
    _store_mask_prob(mp_ref, mask, prob)

    x_bf = x.astype(jnp.bfloat16)
    q3 = _project(x_bf, qw_ref[...])                     # (Bb, N, C) bf16
    k3 = _project(x_bf, kw_ref[...])
    v3 = _project(x_bf, vw_ref[...])
    # TODO(synk): for very large N, tile the (Z, N, N) score block over keys
    # (flash-style online softmax); currently bounded by the Bb VMEM budget.
    o3 = _attention_heads(q3, k3, v3, num_heads)         # (Bb, N, C) bf16
    out = _project(o3, pw_ref[...], out_dtype=jnp.float32)
    out_ref[...] = out + pb_ref[...]


def _attention_sr_kernel(x_ref, qw_ref, kw_ref, vw_ref, pw_ref, pb_ref,
                         nw_ref, nb_ref, out_ref, mp_ref, *, num_heads):
    x = x_ref[...]                                       # (Bb, N, C) f32
    wt, xb, mw, prob, mask = _select_mask(x)
    _store_mask_prob(mp_ref, mask, prob)

    # simFeats_fusion (mask is exactly 0/1, so mask**2 == mask).
    x_po_f = jnp.sum(xb * (mw * mask), axis=1, keepdims=True)           # (Bb,1,C)
    x_ne_f = jnp.sum(xb * (mw * (1.0 - mask)), axis=1, keepdims=True)   # (Bb,1,C)
    x_kv = jnp.concatenate([wt, x_po_f, x_ne_f], axis=1)                # (Bb,3,C)

    # LayerNorm over channels (f32; eps matches nn.LayerNorm default).
    mu = jnp.mean(x_kv, axis=-1, keepdims=True)
    var = jnp.mean(jnp.square(x_kv - mu), axis=-1, keepdims=True)
    x_kv = (x_kv - mu) * jax.lax.rsqrt(var + 1e-5)
    x_kv = x_kv * nw_ref[...] + nb_ref[...]

    x_bf = x.astype(jnp.bfloat16)
    xkv_bf = x_kv.astype(jnp.bfloat16)
    q3 = _project(x_bf, qw_ref[...])                     # (Bb, N, C) bf16
    k3 = _project(xkv_bf, kw_ref[...])                   # (Bb, 3, C) bf16
    v3 = _project(xkv_bf, vw_ref[...])                   # (Bb, 3, C) bf16
    o3 = _attention_heads(q3, k3, v3, num_heads)         # (Bb, N, C) bf16
    out = _project(o3, pw_ref[...], out_dtype=jnp.float32)
    out_ref[...] = out + pb_ref[...]


# --------------------------------------------------------------------------- #
# Wrapper
# --------------------------------------------------------------------------- #
def _derive_block_b(B, N, C, num_heads, sr_ratio, requested, vmem_budget):
    """Largest batch block (<= requested, <= ceil(B/2)) whose per-step VMEM
    footprint fits the budget.  Conservative: lane/sublane padded estimates."""
    lane = lambda v: ((max(v, 1) + 127) // 128) * 128
    sub = lambda v: ((max(v, 1) + 7) // 8) * 8
    M = N if sr_ratio == 1 else 3
    d = C // num_heads
    weights = 6 * sub(C) * lane(C) * 2                              # bf16 weights (+slack)
    requested = max(1, min(requested, B))
    if B >= 2:
        requested = max(1, min(requested, (B + 1) // 2))            # grid >= 2 (dual-TC)
    best = 1
    for bb in range(1, requested + 1):
        x_io = 2 * 2 * bb * sub(N) * lane(C) * 4                    # dbl-buffered f32 x + out
        mp_o = 2 * bb * sub(2) * lane(N - 1) * 4
        proj = bb * (sub(N) + 2 * sub(M)) * lane(C) * 2             # bf16 q,k,v full width
        hsplit = bb * num_heads * (2 * sub(N) + 2 * sub(M)) * lane(d) * 2
        score = bb * num_heads * sub(N) * lane(M) * (4 + 2)         # f32 s + bf16 p
        merged = bb * sub(N) * lane(C) * (2 + 4)                    # merged bf16 + f32 out
        total = weights + x_io + mp_o + proj + hsplit + score + merged + (4 << 20)
        if total <= vmem_budget:
            best = bb
    return best


def attention_pallas(x, params, *, num_heads, sr_ratio, block_b=8):
    B, N, C = x.shape
    assert C % num_heads == 0
    d = C // num_heads
    scale = d ** -0.5
    x = x.astype(jnp.float32)

    # Hardware-aware VMEM budget (v7x: 64 MiB physical, v5e/v6e: 128 MiB).
    try:
        vmem_cap = int(pltpu.get_tpu_info().vmem_capacity_bytes)
    except Exception:
        vmem_cap = 64 * 1024 * 1024
    vmem_limit = int(min(vmem_cap * 3 // 4, 96 * 1024 * 1024))

    Bb = _derive_block_b(B, N, C, num_heads, sr_ratio, block_b, vmem_limit)
    B_pad = ((B + Bb - 1) // Bb) * Bb
    if B_pad != B:
        x = jnp.concatenate([x, jnp.zeros((B_pad - B, N, C), x.dtype)], axis=0)
    grid = (B_pad // Bb,)

    # Host-side weight prep: fold qk scale into q, un-split (C, C)/(C, 2C->split)
    # slabs, bf16 MXU operands (halves weight DMA).
    qw = (params["q_w"].astype(jnp.float32) * scale).astype(jnp.bfloat16)  # (C, C)
    kw = params["kv_w"][:, :C].astype(jnp.bfloat16)                        # (C, C)
    vw = params["kv_w"][:, C:].astype(jnp.bfloat16)                        # (C, C)
    pw = params["proj_w"].astype(jnp.bfloat16)                             # (C, C)
    pb = params["proj_b"].reshape(1, C).astype(jnp.float32)

    x_spec = pl.BlockSpec((Bb, N, C), lambda i: (i, 0, 0))
    out_shapes = (
        jax.ShapeDtypeStruct((B_pad, N, C), jnp.float32),       # attention out
        jax.ShapeDtypeStruct((B_pad, 2, N - 1), jnp.float32),   # [mask ; prob] lane-dense
    )
    out_specs = [
        pl.BlockSpec((Bb, N, C), lambda i: (i, 0, 0)),
        pl.BlockSpec((Bb, 2, N - 1), lambda i: (i, 0, 0)),
    ]

    if sr_ratio > 1:
        kernel = functools.partial(_attention_sr_kernel, num_heads=num_heads)
        in_specs = [
            x_spec,
            _invariant_spec((C, C)), _invariant_spec((C, C)),
            _invariant_spec((C, C)), _invariant_spec((C, C)),
            _invariant_spec((1, C)),
            _invariant_spec((1, C)), _invariant_spec((1, C)),
        ]
        args = (x, qw, kw, vw, pw, pb,
                params["norm_w"].reshape(1, C).astype(jnp.float32),
                params["norm_b"].reshape(1, C).astype(jnp.float32))
    else:
        kernel = functools.partial(_attention_full_kernel, num_heads=num_heads)
        in_specs = [
            x_spec,
            _invariant_spec((C, C)), _invariant_spec((C, C)),
            _invariant_spec((C, C)), _invariant_spec((C, C)),
            _invariant_spec((1, C)),
        ]
        args = (x, qw, kw, vw, pw, pb)

    out, mp = pl.pallas_call(
        kernel,
        out_shape=out_shapes,
        grid_spec=pltpu.PrefetchScalarGridSpec(
            num_scalar_prefetch=0,
            grid=grid,
            in_specs=in_specs,
            out_specs=out_specs,
        ),
        compiler_params=pltpu.CompilerParams(
            dimension_semantics=("parallel",),   # batches are fully independent
            vmem_limit_bytes=vmem_limit,
        ),
    )(*args)

    out = out[:B]
    mask = mp[:B, 0, :][..., None]               # (B, N-1, 1)
    prob = mp[:B, 1, :][..., None]               # (B, N-1, 1)
    return out, mask, prob


# --------------------------------------------------------------------------- #
# Deterministic parameter init (mirrors the module's __init__ shapes);
# trunc_normal(std=0.02) approximated by a plain normal draw (synthetic init).
# --------------------------------------------------------------------------- #
def init_params(key, dim):
    k0, k1, k2 = jax.random.split(key, 3)
    return dict(
        q_w=jax.random.normal(k0, (dim, dim), jnp.float32) * 0.02,
        kv_w=jax.random.normal(k1, (dim, 2 * dim), jnp.float32) * 0.02,
        proj_w=jax.random.normal(k2, (dim, dim), jnp.float32) * 0.02,
        proj_b=jnp.zeros((1, dim), jnp.float32),
        norm_w=jnp.ones((1, dim), jnp.float32),
        norm_b=jnp.zeros((1, dim), jnp.float32),
    )


# --------------------------------------------------------------------------- #
# Pure-JAX reference (direct transcription of the PyTorch forward).
# --------------------------------------------------------------------------- #
def attention_ref(x, params, *, num_heads, sr_ratio):
    B, N, C = x.shape
    d = C // num_heads
    scale = d ** -0.5
    wt = x[:, :1, :]
    xb = x[:, 1:, :]
    mask_weight = jnp.sum(xb * wt, axis=-1, keepdims=True)       # (B, N-1, 1)
    mask_prob = jax.nn.sigmoid(mask_weight)
    mask = (mask_prob > 0.5).astype(jnp.float32)
    mask_count = mask.sum(axis=(1, 2))
    mask = jnp.where((mask_count == 0.0)[:, None, None], jnp.ones_like(mask), mask)

    q = x @ params["q_w"]
    q = q.reshape(B, N, num_heads, d).transpose(0, 2, 1, 3)

    if sr_ratio > 1:
        x_po_f = ((xb * mask) * (mask_weight * mask)).sum(axis=1, keepdims=True)
        neg = 1.0 - mask
        x_ne_f = ((xb * neg) * (mask_weight * neg)).sum(axis=1, keepdims=True)
        x_ = jnp.concatenate([wt, x_po_f, x_ne_f], axis=1)        # (B, 3, C)
        mu = x_.mean(-1, keepdims=True)
        var = ((x_ - mu) ** 2).mean(-1, keepdims=True)
        x_ = (x_ - mu) / jnp.sqrt(var + 1e-5)
        x_ = x_ * params["norm_w"][None] + params["norm_b"][None]
        kv_in = x_
    else:
        kv_in = x

    kv = kv_in @ params["kv_w"]
    M = kv.shape[1]
    kv = kv.reshape(B, M, 2, num_heads, d).transpose(2, 0, 3, 1, 4)
    k, v = kv[0], kv[1]
    attn = jnp.einsum("bhnd,bhmd->bhnm", q, k) * scale
    attn = jax.nn.softmax(attn, axis=-1)
    out = jnp.einsum("bhnm,bhmd->bhnd", attn, v)
    out = out.transpose(0, 2, 1, 3).reshape(B, N, C)
    out = out @ params["proj_w"] + params["proj_b"]
    return out, mask, mask_prob


if __name__ == "__main__":
    key = jax.random.PRNGKey(0)
    B, Hsp, Wsp, C, num_heads = 4, 4, 4, 32, 4
    N = 1 + Hsp * Wsp          # weight token + H*W spatial tokens

    k_x, k_p = jax.random.split(key)
    x = jax.random.normal(k_x, (B, N, C), jnp.float32)
    params = init_params(k_p, C)

    for sr_ratio in (2, 1):     # exercise both branches of the module
        out, mask, prob = attention_pallas(x, params, num_heads=num_heads,
                                           sr_ratio=sr_ratio, block_b=4)
        jax.block_until_ready((out, mask, prob))

        ref_out, ref_mask, ref_prob = attention_ref(x, params,
                                                    num_heads=num_heads,
                                                    sr_ratio=sr_ratio)
        assert np.allclose(np.asarray(out), np.asarray(ref_out),
                           atol=2e-2, rtol=2e-2), f"out mismatch sr={sr_ratio}"
        assert np.allclose(np.asarray(mask), np.asarray(ref_mask)), \
            f"mask mismatch sr={sr_ratio}"
        assert np.allclose(np.asarray(prob), np.asarray(ref_prob),
                           atol=2e-2, rtol=2e-2), f"prob mismatch sr={sr_ratio}"

    print("KERNEL_OK")
</pallas_src>

<mosaic_0001>
module attributes {stable_mosaic.version = 11 : i64} {
  func.func @_attention_sr_kernel(%arg0: i32, %arg1: memref<2x17x32xf32, #tpu.memory_space<vmem>>, %arg2: memref<32x32xbf16, #tpu.memory_space<vmem>>, %arg3: memref<32x32xbf16, #tpu.memory_space<vmem>>, %arg4: memref<32x32xbf16, #tpu.memory_space<vmem>>, %arg5: memref<32x32xbf16, #tpu.memory_space<vmem>>, %arg6: memref<1x32xf32, #tpu.memory_space<vmem>>, %arg7: memref<1x32xf32, #tpu.memory_space<vmem>>, %arg8: memref<1x32xf32, #tpu.memory_space<vmem>>, %arg9: memref<2x17x32xf32, #tpu.memory_space<vmem>>, %arg10: memref<2x2x16xf32, #tpu.memory_space<vmem>>) attributes {dimension_semantics = [#tpu.dimension_semantics<parallel>], iteration_bounds = array<i64: 2>, scalar_prefetch = 0 : i64, scratch_operands = 0 : i64, tpu.core_type = #tpu.core_type<tc>, window_params = [{transform_indices = @transform_0, window_bounds = array<i64: 2, 17, 32>}, {pipeline_mode = #tpu.pipeline_mode<synchronous>, transform_indices = @transform_1, window_bounds = array<i64: 32, 32>}, {pipeline_mode = #tpu.pipeline_mode<synchronous>, transform_indices = @transform_2, window_bounds = array<i64: 32, 32>}, {pipeline_mode = #tpu.pipeline_mode<synchronous>, transform_indices = @transform_3, window_bounds = array<i64: 32, 32>}, {pipeline_mode = #tpu.pipeline_mode<synchronous>, transform_indices = @transform_4, window_bounds = array<i64: 32, 32>}, {pipeline_mode = #tpu.pipeline_mode<synchronous>, transform_indices = @transform_5, window_bounds = array<i64: 1, 32>}, {pipeline_mode = #tpu.pipeline_mode<synchronous>, transform_indices = @transform_6, window_bounds = array<i64: 1, 32>}, {pipeline_mode = #tpu.pipeline_mode<synchronous>, transform_indices = @transform_7, window_bounds = array<i64: 1, 32>}, {transform_indices = @transform_8, window_bounds = array<i64: 2, 17, 32>}, {transform_indices = @transform_9, window_bounds = array<i64: 2, 2, 16>}]} {
    %c0 = arith.constant 0 : index
    %c0_0 = arith.constant 0 : index
    %c0_1 = arith.constant 0 : index
    %0 = vector.load %arg1[%c0, %c0_0, %c0_1] : memref<2x17x32xf32, #tpu.memory_space<vmem>>, vector<2x17x32xf32>
    %1 = vector.extract_strided_slice %0 {offsets = [0, 0, 0], sizes = [2, 1, 32], strides = [1, 1, 1]} : vector<2x17x32xf32> to vector<2x1x32xf32>
    %2 = vector.extract_strided_slice %0 {offsets = [0, 1, 0], sizes = [2, 16, 32], strides = [1, 1, 1]} : vector<2x17x32xf32> to vector<2x16x32xf32>
    %3 = vector.broadcast %1 : vector<2x1x32xf32> to vector<2x16x32xf32>
    %4 = arith.mulf %2, %3 : vector<2x16x32xf32>
    %cst = arith.constant dense<0.000000e+00> : vector<2x16xf32>
    %5 = vector.multi_reduction <add>, %4, %cst [2] : vector<2x16x32xf32> to vector<2x16xf32>
    %6 = vector.shape_cast %5 : vector<2x16xf32> to vector<2x16x1xf32>
    %7 = arith.negf %6 : vector<2x16x1xf32>
    %8 = math.exp %7 : vector<2x16x1xf32>
    %cst_2 = arith.constant 1.000000e+00 : f32
    %9 = vector.broadcast %cst_2 : f32 to vector<2x16x1xf32>
    %10 = arith.addf %9, %8 : vector<2x16x1xf32>
    %11 = arith.divf %9, %10 : vector<2x16x1xf32>
    %cst_3 = arith.constant 5.000000e-01 : f32
    %12 = vector.broadcast %cst_3 : f32 to vector<2x16x1xf32>
    %13 = arith.cmpf ogt, %11, %12 : vector<2x16x1xf32>
    %14 = arith.extui %13 : vector<2x16x1xi1> to vector<2x16x1xi32>
    %15 = arith.sitofp %14 : vector<2x16x1xi32> to vector<2x16x1xf32>
    %cst_4 = arith.constant dense<0.000000e+00> : vector<2x1xf32>
    %16 = vector.multi_reduction <add>, %15, %cst_4 [1] : vector<2x16x1xf32> to vector<2x1xf32>
    %17 = vector.shape_cast %16 : vector<2x1xf32> to vector<2x1x1xf32>
    %cst_5 = arith.constant 0.000000e+00 : f32
    %18 = vector.broadcast %cst_5 : f32 to vector<2x1x1xf32>
    %19 = arith.cmpf oeq, %17, %18 : vector<2x1x1xf32>
    %cst_6 = arith.constant 1.000000e+00 : f32
    %20 = vector.broadcast %cst_6 : f32 to vector<2x16x1xf32>
    %21 = vector.shape_cast %19 : vector<2x1x1xi1> to vector<2x1x1xi1>
    %22 = vector.broadcast %21 : vector<2x1x1xi1> to vector<2x16x1xi1>
    %23 = arith.select %22, %20, %15 : vector<2x16x1xi1>, vector<2x16x1xf32>
    %24 = tpu.transpose %23, [0, 2, 1] : vector<2x16x1xf32> -> vector<2x1x16xf32>
    %25 = tpu.transpose %11, [0, 2, 1] : vector<2x16x1xf32> -> vector<2x1x16xf32>
    %26 = tpu.concatenate %24, %25 in 1 : vector<2x1x16xf32>, vector<2x1x16xf32> -> vector<2x2x16xf32>
    %c0_7 = arith.constant 0 : index
    %c0_8 = arith.constant 0 : index
    %c0_9 = arith.constant 0 : index
    %27 = vector.load %arg10[%c0_7, %c0_8, %c0_9] : memref<2x2x16xf32, #tpu.memory_space<vmem>>, vector<2x2x16xf32>
    tpu.vector_store %arg10[%c0_7, %c0_8, %c0_9], %26 {strides = array<i32>} : memref<2x2x16xf32, #tpu.memory_space<vmem>>, vector<2x2x16xf32>,
    %28 = arith.mulf %6, %23 : vector<2x16x1xf32>
    %29 = vector.broadcast %28 : vector<2x16x1xf32> to vector<2x16x32xf32>
    %30 = arith.mulf %2, %29 : vector<2x16x32xf32>
    %cst_10 = arith.constant dense<0.000000e+00> : vector<2x32xf32>
    %31 = vector.multi_reduction <add>, %30, %cst_10 [1] : vector<2x16x32xf32> to vector<2x32xf32>
    %32 = vector.shape_cast %31 : vector<2x32xf32> to vector<2x1x32xf32>
    %cst_11 = arith.constant 1.000000e+00 : f32
    %33 = vector.broadcast %cst_11 : f32 to vector<2x16x1xf32>
    %34 = arith.subf %33, %23 : vector<2x16x1xf32>
    %35 = arith.mulf %6, %34 : vector<2x16x1xf32>
    %36 = vector.broadcast %35 : vector<2x16x1xf32> to vector<2x16x32xf32>
    %37 = arith.mulf %2, %36 : vector<2x16x32xf32>
    %cst_12 = arith.constant dense<0.000000e+00> : vector<2x32xf32>
    %38 = vector.multi_reduction <add>, %37, %cst_12 [1] : vector<2x16x32xf32> to vector<2x32xf32>
    %39 = vector.shape_cast %38 : vector<2x32xf32> to vector<2x1x32xf32>
    %40 = tpu.concatenate %1, %32, %39 in 1 : vector<2x1x32xf32>, vector<2x1x32xf32>, vector<2x1x32xf32> -> vector<2x3x32xf32>
    %cst_13 = arith.constant dense<0.000000e+00> : vector<2x3xf32>
    %41 = vector.multi_reduction <add>, %40, %cst_13 [2] : vector<2x3x32xf32> to vector<2x3xf32>
    %42 = vector.shape_cast %41 : vector<2x3xf32> to vector<2x3x1xf32>
    %cst_14 = arith.constant 3.200000e+01 : f32
    %43 = vector.broadcast %cst_14 : f32 to vector<2x3x1xf32>
    %44 = arith.divf %42, %43 : vector<2x3x1xf32>
    %45 = vector.broadcast %44 : vector<2x3x1xf32> to vector<2x3x32xf32>
    %46 = arith.subf %40, %45 : vector<2x3x32xf32>
    %47 = arith.mulf %46, %46 : vector<2x3x32xf32>
    %cst_15 = arith.constant dense<0.000000e+00> : vector<2x3xf32>
    %48 = vector.multi_reduction <add>, %47, %cst_15 [2] : vector<2x3x32xf32> to vector<2x3xf32>
    %49 = vector.shape_cast %48 : vector<2x3xf32> to vector<2x3x1xf32>
    %cst_16 = arith.constant 3.200000e+01 : f32
    %50 = vector.broadcast %cst_16 : f32 to vector<2x3x1xf32>
    %51 = arith.divf %49, %50 : vector<2x3x1xf32>
    %52 = vector.broadcast %44 : vector<2x3x1xf32> to vector<2x3x32xf32>
    %53 = arith.subf %40, %52 : vector<2x3x32xf32>
    %cst_17 = arith.constant 9.99999974E-6 : f32
    %54 = vector.broadcast %cst_17 : f32 to vector<2x3x1xf32>
    %55 = arith.addf %51, %54 : vector<2x3x1xf32>
    %56 = math.rsqrt %55 : vector<2x3x1xf32>
    %57 = vector.broadcast %56 : vector<2x3x1xf32> to vector<2x3x32xf32>
    %58 = arith.mulf %53, %57 : vector<2x3x32xf32>
    %c0_18 = arith.constant 0 : index
    %c0_19 = arith.constant 0 : index
    %59 = vector.load %arg7[%c0_18, %c0_19] : memref<1x32xf32, #tpu.memory_space<vmem>>, vector<1x32xf32>
    %60 = vector.shape_cast %59 : vector<1x32xf32> to vector<1x1x32xf32>
    %61 = vector.broadcast %60 : vector<1x1x32xf32> to vector<2x3x32xf32>
    %62 = arith.mulf %58, %61 : vector<2x3x32xf32>
    %c0_20 = arith.constant 0 : index
    %c0_21 = arith.constant 0 : index
    %63 = vector.load %arg8[%c0_20, %c0_21] : memref<1x32xf32, #tpu.memory_space<vmem>>, vector<1x32xf32>
    %64 = vector.shape_cast %63 : vector<1x32xf32> to vector<1x1x32xf32>
    %65 = vector.broadcast %64 : vector<1x1x32xf32> to vector<2x3x32xf32>
    %66 = arith.addf %62, %65 : vector<2x3x32xf32>
    %67 = arith.truncf %0 : vector<2x17x32xf32> to vector<2x17x32xbf16>
    %68 = arith.truncf %66 : vector<2x3x32xf32> to vector<2x3x32xbf16>
    %c0_22 = arith.constant 0 : index
    %c0_23 = arith.constant 0 : index
    %69 = vector.load %arg2[%c0_22, %c0_23] : memref<32x32xbf16, #tpu.memory_space<vmem>>, vector<32x32xbf16>
    %70 = vector.extract_strided_slice %67 {offsets = [0, 0, 0], sizes = [1, 17, 32], strides = [1, 1, 1]} : vector<2x17x32xbf16> to vector<1x17x32xbf16>
    %71 = vector.shape_cast %70 : vector<1x17x32xbf16> to vector<17x32xbf16>
    %cst_24 = arith.constant dense<0.000000e+00> : vector<17x32xf32>
    %72 = tpu.matmul %71, %69, %cst_24 {dimension_numbers = #tpu.dot_dimension_numbers<[1], [0], [0], [1], [0, 0, 1, 1], [], []>} : vector<17x32xbf16>, vector<32x32xbf16>, vector<17x32xf32> -> vector<17x32xf32>
    %73 = vector.shape_cast %72 : vector<17x32xf32> to vector<1x17x32xf32>
    %74 = vector.extract_strided_slice %67 {offsets = [1, 0, 0], sizes = [1, 17, 32], strides = [1, 1, 1]} : vector<2x17x32xbf16> to vector<1x17x32xbf16>
    %75 = vector.shape_cast %74 : vector<1x17x32xbf16> to vector<17x32xbf16>
    %cst_25 = arith.constant dense<0.000000e+00> : vector<17x32xf32>
    %76 = tpu.matmul %75, %69, %cst_25 {dimension_numbers = #tpu.dot_dimension_numbers<[1], [0], [0], [1], [0, 0, 1, 1], [], []>} : vector<17x32xbf16>, vector<32x32xbf16>, vector<17x32xf32> -> vector<17x32xf32>
    %77 = vector.shape_cast %76 : vector<17x32xf32> to vector<1x17x32xf32>
    %78 = tpu.concatenate %73, %77 in 0 : vector<1x17x32xf32>, vector<1x17x32xf32> -> vector<2x17x32xf32>
    %79 = arith.truncf %78 : vector<2x17x32xf32> to vector<2x17x32xbf16>
    %c0_26 = arith.constant 0 : index
    %c0_27 = arith.constant 0 : index
    %80 = vector.load %arg3[%c0_26, %c0_27] : memref<32x32xbf16, #tpu.memory_space<vmem>>, vector<32x32xbf16>
    %81 = vector.extract_strided_slice %68 {offsets = [0, 0, 0], sizes = [1, 3, 32], strides = [1, 1, 1]} : vector<2x3x32xbf16> to vector<1x3x32xbf16>
    %82 = vector.shape_cast %81 : vector<1x3x32xbf16> to vector<3x32xbf16>
    %cst_28 = arith.constant dense<0.000000e+00> : vector<3x32xf32>
    %83 = tpu.matmul %82, %80, %cst_28 {dimension_numbers = #tpu.dot_dimension_numbers<[1], [0], [0], [1], [0, 0, 1, 1], [], []>} : vector<3x32xbf16>, vector<32x32xbf16>, vector<3x32xf32> -> vector<3x32xf32>
    %84 = vector.shape_cast %83 : vector<3x32xf32> to vector<1x3x32xf32>
    %85 = vector.extract_strided_slice %68 {offsets = [1, 0, 0], sizes = [1, 3, 32], strides = [1, 1, 1]} : vector<2x3x32xbf16> to vector<1x3x32xbf16>
    %86 = vector.shape_cast %85 : vector<1x3x32xbf16> to vector<3x32xbf16>
    %cst_29 = arith.constant dense<0.000000e+00> : vector<3x32xf32>
    %87 = tpu.matmul %86, %80, %cst_29 {dimension_numbers = #tpu.dot_dimension_numbers<[1], [0], [0], [1], [0, 0, 1, 1], [], []>} : vector<3x32xbf16>, vector<32x32xbf16>, vector<3x32xf32> -> vector<3x32xf32>
    %88 = vector.shape_cast %87 : vector<3x32xf32> to vector<1x3x32xf32>
    %89 = tpu.concatenate %84, %88 in 0 : vector<1x3x32xf32>, vector<1x3x32xf32> -> vector<2x3x32xf32>
    %90 = arith.truncf %89 : vector<2x3x32xf32> to vector<2x3x32xbf16>
    %c0_30 = arith.constant 0 : index
    %c0_31 = arith.constant 0 : index
    %91 = vector.load %arg4[%c0_30, %c0_31] : memref<32x32xbf16, #tpu.memory_space<vmem>>, vector<32x32xbf16>
    %92 = vector.extract_strided_slice %68 {offsets = [0, 0, 0], sizes = [1, 3, 32], strides = [1, 1, 1]} : vector<2x3x32xbf16> to vector<1x3x32xbf16>
    %93 = vector.shape_cast %92 : vector<1x3x32xbf16> to vector<3x32xbf16>
    %cst_32 = arith.constant dense<0.000000e+00> : vector<3x32xf32>
    %94 = tpu.matmul %93, %91, %cst_32 {dimension_numbers = #tpu.dot_dimension_numbers<[1], [0], [0], [1], [0, 0, 1, 1], [], []>} : vector<3x32xbf16>, vector<32x32xbf16>, vector<3x32xf32> -> vector<3x32xf32>
    %95 = vector.shape_cast %94 : vector<3x32xf32> to vector<1x3x32xf32>
    %96 = vector.extract_strided_slice %68 {offsets = [1, 0, 0], sizes = [1, 3, 32], strides = [1, 1, 1]} : vector<2x3x32xbf16> to vector<1x3x32xbf16>
    %97 = vector.shape_cast %96 : vector<1x3x32xbf16> to vector<3x32xbf16>
    %cst_33 = arith.constant dense<0.000000e+00> : vector<3x32xf32>
    %98 = tpu.matmul %97, %91, %cst_33 {dimension_numbers = #tpu.dot_dimension_numbers<[1], [0], [0], [1], [0, 0, 1, 1], [], []>} : vector<3x32xbf16>, vector<32x32xbf16>, vector<3x32xf32> -> vector<3x32xf32>
    %99 = vector.shape_cast %98 : vector<3x32xf32> to vector<1x3x32xf32>
    %100 = tpu.concatenate %95, %99 in 0 : vector<1x3x32xf32>, vector<1x3x32xf32> -> vector<2x3x32xf32>
    %101 = arith.truncf %100 : vector<2x3x32xf32> to vector<2x3x32xbf16>
    %102 = vector.extract_strided_slice %79 {offsets = [0, 0, 0], sizes = [2, 17, 8], strides = [1, 1, 1]} : vector<2x17x32xbf16> to vector<2x17x8xbf16>
    %103 = vector.extract_strided_slice %79 {offsets = [0, 0, 8], sizes = [2, 17, 8], strides = [1, 1, 1]} : vector<2x17x32xbf16> to vector<2x17x8xbf16>
    %104 = vector.extract_strided_slice %79 {offsets = [0, 0, 16], sizes = [2, 17, 8], strides = [1, 1, 1]} : vector<2x17x32xbf16> to vector<2x17x8xbf16>
    %105 = vector.extract_strided_slice %79 {offsets = [0, 0, 24], sizes = [2, 17, 8], strides = [1, 1, 1]} : vector<2x17x32xbf16> to vector<2x17x8xbf16>
    %106 = tpu.concatenate %102, %103, %104, %105 in 0 : vector<2x17x8xbf16>, vector<2x17x8xbf16>, vector<2x17x8xbf16>, vector<2x17x8xbf16> -> vector<8x17x8xbf16>
    %107 = vector.extract_strided_slice %90 {offsets = [0, 0, 0], sizes = [2, 3, 8], strides = [1, 1, 1]} : vector<2x3x32xbf16> to vector<2x3x8xbf16>
    %108 = vector.extract_strided_slice %90 {offsets = [0, 0, 8], sizes = [2, 3, 8], strides = [1, 1, 1]} : vector<2x3x32xbf16> to vector<2x3x8xbf16>
    %109 = vector.extract_strided_slice %90 {offsets = [0, 0, 16], sizes = [2, 3, 8], strides = [1, 1, 1]} : vector<2x3x32xbf16> to vector<2x3x8xbf16>
    %110 = vector.extract_strided_slice %90 {offsets = [0, 0, 24], sizes = [2, 3, 8], strides = [1, 1, 1]} : vector<2x3x32xbf16> to vector<2x3x8xbf16>
    %111 = tpu.concatenate %107, %108, %109, %110 in 0 : vector<2x3x8xbf16>, vector<2x3x8xbf16>, vector<2x3x8xbf16>, vector<2x3x8xbf16> -> vector<8x3x8xbf16>
    %112 = vector.extract_strided_slice %101 {offsets = [0, 0, 0], sizes = [2, 3, 8], strides = [1, 1, 1]} : vector<2x3x32xbf16> to vector<2x3x8xbf16>
    %113 = vector.extract_strided_slice %101 {offsets = [0, 0, 8], sizes = [2, 3, 8], strides = [1, 1, 1]} : vector<2x3x32xbf16> to vector<2x3x8xbf16>
    %114 = vector.extract_strided_slice %101 {offsets = [0, 0, 16], sizes = [2, 3, 8], strides = [1, 1, 1]} : vector<2x3x32xbf16> to vector<2x3x8xbf16>
    %115 = vector.extract_strided_slice %101 {offsets = [0, 0, 24], sizes = [2, 3, 8], strides = [1, 1, 1]} : vector<2x3x32xbf16> to vector<2x3x8xbf16>
    %116 = tpu.concatenate %112, %113, %114, %115 in 0 : vector<2x3x8xbf16>, vector<2x3x8xbf16>, vector<2x3x8xbf16>, vector<2x3x8xbf16> -> vector<8x3x8xbf16>
    "tpu.trace_start"() <{level = 10 : i32, message = "znd,zmd->znm"}> : () -> ()
    %cst_34 = arith.constant dense<0.000000e+00> : vector<8x17x3xf32>
    %117 = tpu.matmul %106, %111, %cst_34 {dimension_numbers = #tpu.dot_dimension_numbers<[2], [2], [1], [1], [0, 0, 0, 1, 1, 1], [0], [0]>} : vector<8x17x8xbf16>, vector<8x3x8xbf16>, vector<8x17x3xf32> -> vector<8x17x3xf32>
    "tpu.trace_stop"() : () -> ()
    %cst_35 = arith.constant dense<0xFF800000> : vector<8x17xf32>
    %118 = vector.multi_reduction <maximumf>, %117, %cst_35 [2] : vector<8x17x3xf32> to vector<8x17xf32>
    %119 = vector.shape_cast %118 : vector<8x17xf32> to vector<8x17x1xf32>
    %120 = vector.broadcast %119 : vector<8x17x1xf32> to vector<8x17x3xf32>
    %121 = arith.subf %117, %120 : vector<8x17x3xf32>
    %122 = math.exp %121 : vector<8x17x3xf32>
    %cst_36 = arith.constant dense<0.000000e+00> : vector<8x17xf32>
    %123 = vector.multi_reduction <add>, %122, %cst_36 [2] : vector<8x17x3xf32> to vector<8x17xf32>
    %124 = vector.shape_cast %123 : vector<8x17xf32> to vector<8x17x1xf32>
    %125 = tpu.reciprocal %124 {approx = true} : vector<8x17x1xf32> -> vector<8x17x1xf32>
    %126 = vector.broadcast %125 : vector<8x17x1xf32> to vector<8x17x3xf32>
    %127 = arith.mulf %122, %126 : vector<8x17x3xf32>
    %128 = arith.truncf %127 : vector<8x17x3xf32> to vector<8x17x3xbf16>
    "tpu.trace_start"() <{level = 10 : i32, message = "znm,zmd->znd"}> : () -> ()
    %cst_37 = arith.constant dense<0.000000e+00> : vector<8x17x8xf32>
    %129 = tpu.matmul %128, %116, %cst_37 {dimension_numbers = #tpu.dot_dimension_numbers<[2], [1], [1], [2], [0, 0, 0, 1, 1, 2], [0], [0]>} : vector<8x17x3xbf16>, vector<8x3x8xbf16>, vector<8x17x8xf32> -> vector<8x17x8xf32>
    "tpu.trace_stop"() : () -> ()
    %130 = arith.truncf %129 : vector<8x17x8xf32> to vector<8x17x8xbf16>
    %131 = vector.shape_cast %130 : vector<8x17x8xbf16> to vector<4x2x17x8xbf16>
    %132 = vector.extract_strided_slice %131 {offsets = [0, 0, 0, 0], sizes = [1, 2, 17, 8], strides = [1, 1, 1, 1]} : vector<4x2x17x8xbf16> to vector<1x2x17x8xbf16>
    %133 = vector.shape_cast %132 : vector<1x2x17x8xbf16> to vector<2x17x8xbf16>
    %134 = vector.extract_strided_slice %131 {offsets = [1, 0, 0, 0], sizes = [1, 2, 17, 8], strides = [1, 1, 1, 1]} : vector<4x2x17x8xbf16> to vector<1x2x17x8xbf16>
    %135 = vector.shape_cast %134 : vector<1x2x17x8xbf16> to vector<2x17x8xbf16>
    %136 = vector.extract_strided_slice %131 {offsets = [2, 0, 0, 0], sizes = [1, 2, 17, 8], strides = [1, 1, 1, 1]} : vector<4x2x17x8xbf16> to vector<1x2x17x8xbf16>
    %137 = vector.shape_cast %136 : vector<1x2x17x8xbf16> to vector<2x17x8xbf16>
    %138 = vector.extract_strided_slice %131 {offsets = [3, 0, 0, 0], sizes = [1, 2, 17, 8], strides = [1, 1, 1, 1]} : vector<4x2x17x8xbf16> to vector<1x2x17x8xbf16>
    %139 = vector.shape_cast %138 : vector<1x2x17x8xbf16> to vector<2x17x8xbf16>
    %140 = tpu.concatenate %133, %135, %137, %139 in 2 : vector<2x17x8xbf16>, vector<2x17x8xbf16>, vector<2x17x8xbf16>, vector<2x17x8xbf16> -> vector<2x17x32xbf16>
    %c0_38 = arith.constant 0 : index
    %c0_39 = arith.constant 0 : index
    %141 = vector.load %arg5[%c0_38, %c0_39] : memref<32x32xbf16, #tpu.memory_space<vmem>>, vector<32x32xbf16>
    %142 = vector.extract_strided_slice %140 {offsets = [0, 0, 0], sizes = [1, 17, 32], strides = [1, 1, 1]} : vector<2x17x32xbf16> to vector<1x17x32xbf16>
    %143 = vector.shape_cast %142 : vector<1x17x32xbf16> to vector<17x32xbf16>
    %cst_40 = arith.constant dense<0.000000e+00> : vector<17x32xf32>
    %144 = tpu.matmul %143, %141, %cst_40 {dimension_numbers = #tpu.dot_dimension_numbers<[1], [0], [0], [1], [0, 0, 1, 1], [], []>} : vector<17x32xbf16>, vector<32x32xbf16>, vector<17x32xf32> -> vector<17x32xf32>
    %145 = vector.shape_cast %144 : vector<17x32xf32> to vector<1x17x32xf32>
    %146 = vector.extract_strided_slice %140 {offsets = [1, 0, 0], sizes = [1, 17, 32], strides = [1, 1, 1]} : vector<2x17x32xbf16> to vector<1x17x32xbf16>
    %147 = vector.shape_cast %146 : vector<1x17x32xbf16> to vector<17x32xbf16>
    %cst_41 = arith.constant dense<0.000000e+00> : vector<17x32xf32>
    %148 = tpu.matmul %147, %141, %cst_41 {dimension_numbers = #tpu.dot_dimension_numbers<[1], [0], [0], [1], [0, 0, 1, 1], [], []>} : vector<17x32xbf16>, vector<32x32xbf16>, vector<17x32xf32> -> vector<17x32xf32>
    %149 = vector.shape_cast %148 : vector<17x32xf32> to vector<1x17x32xf32>
    %150 = tpu.concatenate %145, %149 in 0 : vector<1x17x32xf32>, vector<1x17x32xf32> -> vector<2x17x32xf32>
    %c0_42 = arith.constant 0 : index
    %c0_43 = arith.constant 0 : index
    %151 = vector.load %arg6[%c0_42, %c0_43] : memref<1x32xf32, #tpu.memory_space<vmem>>, vector<1x32xf32>
    %152 = vector.shape_cast %151 : vector<1x32xf32> to vector<1x1x32xf32>
    %153 = vector.broadcast %152 : vector<1x1x32xf32> to vector<2x17x32xf32>
    %154 = arith.addf %150, %153 : vector<2x17x32xf32>
    %c0_44 = arith.constant 0 : index
    %c0_45 = arith.constant 0 : index
    %c0_46 = arith.constant 0 : index
    %155 = vector.load %arg9[%c0_44, %c0_45, %c0_46] : memref<2x17x32xf32, #tpu.memory_space<vmem>>, vector<2x17x32xf32>
    tpu.vector_store %arg9[%c0_44, %c0_45, %c0_46], %154 {strides = array<i32>} : memref<2x17x32xf32, #tpu.memory_space<vmem>>, vector<2x17x32xf32>,
    return
  }
  func.func @transform_0(%arg0: i32) -> (i32, i32, i32) {
    %c0_i32 = arith.constant 0 : i32
    %c0_i32_0 = arith.constant 0 : i32
    %c0_i32_1 = arith.constant 0 : i32
    return %arg0, %c0_i32, %c0_i32_0 : i32, i32, i32
  }
  func.func @transform_1(%arg0: i32) -> (i32, i32) {
    %c0_i32 = arith.constant 0 : i32
    %c0_i32_0 = arith.constant 0 : i32
    %c0_i32_1 = arith.constant 0 : i32
    return %c0_i32, %c0_i32_0 : i32, i32
  }
  func.func @transform_2(%arg0: i32) -> (i32, i32) {
    %c0_i32 = arith.constant 0 : i32
    %c0_i32_0 = arith.constant 0 : i32
    %c0_i32_1 = arith.constant 0 : i32
    return %c0_i32, %c0_i32_0 : i32, i32
  }
  func.func @transform_3(%arg0: i32) -> (i32, i32) {
    %c0_i32 = arith.constant 0 : i32
    %c0_i32_0 = arith.constant 0 : i32
    %c0_i32_1 = arith.constant 0 : i32
    return %c0_i32, %c0_i32_0 : i32, i32
  }
  func.func @transform_4(%arg0: i32) -> (i32, i32) {
    %c0_i32 = arith.constant 0 : i32
    %c0_i32_0 = arith.constant 0 : i32
    %c0_i32_1 = arith.constant 0 : i32
    return %c0_i32, %c0_i32_0 : i32, i32
  }
  func.func @transform_5(%arg0: i32) -> (i32, i32) {
    %c0_i32 = arith.constant 0 : i32
    %c0_i32_0 = arith.constant 0 : i32
    %c0_i32_1 = arith.constant 0 : i32
    return %c0_i32, %c0_i32_0 : i32, i32
  }
  func.func @transform_6(%arg0: i32) -> (i32, i32) {
    %c0_i32 = arith.constant 0 : i32
    %c0_i32_0 = arith.constant 0 : i32
    %c0_i32_1 = arith.constant 0 : i32
    return %c0_i32, %c0_i32_0 : i32, i32
  }
  func.func @transform_7(%arg0: i32) -> (i32, i32) {
    %c0_i32 = arith.constant 0 : i32
    %c0_i32_0 = arith.constant 0 : i32
    %c0_i32_1 = arith.constant 0 : i32
    return %c0_i32, %c0_i32_0 : i32, i32
  }
  func.func @transform_8(%arg0: i32) -> (i32, i32, i32) {
    %c0_i32 = arith.constant 0 : i32
    %c0_i32_0 = arith.constant 0 : i32
    %c0_i32_1 = arith.constant 0 : i32
    return %arg0, %c0_i32, %c0_i32_0 : i32, i32, i32
  }
  func.func @transform_9(%arg0: i32) -> (i32, i32, i32) {
    %c0_i32 = arith.constant 0 : i32
    %c0_i32_0 = arith.constant 0 : i32
    %c0_i32_1 = arith.constant 0 : i32
    return %arg0, %c0_i32, %c0_i32_0 : i32, i32, i32
  }
}

</mosaic_0001>

<llo_original>
// kernel: tpu_custom_call.1
$region0: #{tpu_custom_call.1}
  #allocation0 [shape = 'u32[]', space=smem, size = 0x4, offset = 0x4, fixed_abs, tag = 'smem constant byte address 0x4 - core index']
  #allocation1 [shape = 'u32[72,128]{1,0:T(1,128)}', space=vmem, size = 0x9000, scoped, tag = 'internal scratch']
  %s0 = inlined_call_operand.vmem [shape: f32[4,17,32], index: 0, kind: input, shape index: {}]
  %s1 = inlined_call_operand.vmem [shape: bf16[32,32], index: 1, kind: input, shape index: {}]
  %s2 = inlined_call_operand.vmem [shape: bf16[32,32], index: 2, kind: input, shape index: {}]
  %s3 = inlined_call_operand.vmem [shape: bf16[32,32], index: 3, kind: input, shape index: {}]
  %s4 = inlined_call_operand.vmem [shape: bf16[32,32], index: 4, kind: input, shape index: {}]
  %s5 = inlined_call_operand.vmem [shape: f32[1,32], index: 5, kind: input, shape index: {}]
  %s6 = inlined_call_operand.vmem [shape: f32[1,32], index: 6, kind: input, shape index: {}]
  %s7 = inlined_call_operand.vmem [shape: f32[1,32], index: 7, kind: input, shape index: {}]
  %s8 = inlined_call_operand.vmem [shape: f32[4,17,32], index: 8, kind: output, shape index: {0}]
  %s9 = inlined_call_operand.hbm [shape: f32[4,2,16], index: 9, kind: output, shape index: {1}]
  %10 = xla_tuple %s8, %s9
  %s11 = sld [smem:[#allocation0]]
  $region73: #{tpu_custom_call.1} parent=0
    _
  %s13 = ssub.s32 1, %s11
  %s14 = scalar_select 0, %s13, %s11
  $region1: #{tpu_custom_call.1} parent=0
    #allocation2 [shape = 'u8[4096]{0}', space=vmem, size = 0x1000, scoped, tag = 'output window, operand 1']
    #allocation3 [shape = 's32[2]{0}', space=sflag, size = 0x8, scoped, tag = 'scoped memory for tpu_custom_call.1']
    %15 = vsyncpa [#allocation3], 0
    %s16 = scalar_lea.sflag [#allocation3], 1
    %17 = vsyncpa %s16, 0
    loop: start=0, step=1, limit=4
    $region2: #{tpu_custom_call.1} parent=1 // loop_pre_header
      _
    $region3: #{tpu_custom_call.1} parent=1 // loop_header
      %s19 = sphi 0, %s23
      %p20 = scmp.ge.s32.totalorder %s19, 4
      %s29 = sphi 0, %s31
      %s32 = sphi 0, %s29
      %s33 = sphi 0, %s32
      %s49 = sphi 0, %s33
      %s53 = sphi 0, %s53
      %s55 = sphi 0, %s53
      %s56 = sphi 0, %s55
      %s70 = sphi 0, %s56
      %s74 = sphi 0, %s74
      %s76 = sphi 0, %s74
      %s77 = sphi 0, %s76
      %s91 = sphi 0, %s77
      %s95 = sphi 0, %s95
      %s97 = sphi 0, %s95
      %s98 = sphi 0, %s97
      %s112 = sphi 0, %s98
      %s116 = sphi 0, %s116
      %s118 = sphi 0, %s116
      %s119 = sphi 0, %s118
      %s133 = sphi 0, %s119
      %s137 = sphi 0, %s137
      %s139 = sphi 0, %s137
      %s140 = sphi 0, %s139
      %s154 = sphi 0, %s140
      %s158 = sphi 0, %s158
      %s160 = sphi 0, %s158
      %s161 = sphi 0, %s160
      %s175 = sphi 0, %s161
      %s179 = sphi 0, %s179
      %s181 = sphi 0, %s179
      %s182 = sphi 0, %s181
      %s196 = sphi 0, %s182
      %s202 = sphi 0, %s204
      %s205 = sphi 0, %s202
      %s206 = sphi 0, %s205
      %s222 = sphi 0, %s206
      %s228 = sphi 0, %s230
      %s231 = sphi 0, %s228
      %s232 = sphi 0, %s231
      %s248 = sphi 0, %s232
    $region4: #{tpu_custom_call.1} parent=1 // loop_header_branch
      %22 = sbr.rel (%p20) target = $region8
    $region5: #{tpu_custom_call.1} parent=1 // loop_body
      %s24 = ssub.s32 %s19, 1
      %s25 = ssub.s32 %s19, 2
      %s26 = sadd.s32 %s19, 1
      %s27 = ssub.s32 %s19, %s26
      %p28 = scmp.eq.s32.totalorder %s27, 0
      %s30 = sadd.s32 %s29, 1
      %s31 = scalar_select %p28, %s29, %s30
      %p34 = pneg %p28
      %p35 = scmp.eq.s32.totalorder %s19, 1
      %p36 = por %p34, %p35
      %p37 = scmp.ne.s32.totalorder %s29, %s32
      %p38 = scmp.eq.s32.totalorder %s19, 0
      %p39 = por %p37, %p38
      %p40 = scmp.ne.s32.totalorder %s29, %s32
      %p41 = scmp.eq.s32.totalorder %s24, 1
      %p42 = por %p40, %p41
      %p43 = scmp.ne.s32.totalorder %s32, %s33
      %p44 = scmp.eq.s32.totalorder %s24, 0
      %p45 = por %p43, %p44
      %p46 = scmp.ne.s32.totalorder %s32, %s33
      %p47 = scmp.eq.s32.totalorder %s25, 1
      %p48 = por %p46, %p47
      %p50 = scmp.ne.s32.totalorder %s33, %s49
      %p51 = scmp.eq.s32.totalorder %s25, 0
      %p52 = por %p50, %p51
      %s54 = sadd.s32 %s53, 1
      %p57 = scmp.eq.s32.totalorder %s19, 1
      %p58 = scmp.ne.s32.totalorder %s53, %s55
      %p59 = scmp.eq.s32.totalorder %s19, 0
      %p60 = por %p58, %p59
      %p61 = scmp.ne.s32.totalorder %s53, %s55
      %p62 = scmp.eq.s32.totalorder %s24, 1
      %p63 = por %p61, %p62
      %p64 = scmp.ne.s32.totalorder %s55, %s56
      %p65 = scmp.eq.s32.totalorder %s24, 0
      %p66 = por %p64, %p65
      %p67 = scmp.ne.s32.totalorder %s55, %s56
      %p68 = scmp.eq.s32.totalorder %s25, 1
      %p69 = por %p67, %p68
      %p71 = scmp.ne.s32.totalorder %s56, %s70
      %p72 = scmp.eq.s32.totalorder %s25, 0
      %p73 = por %p71, %p72
      %s75 = sadd.s32 %s74, 1
      %p78 = scmp.eq.s32.totalorder %s19, 1
      %p79 = scmp.ne.s32.totalorder %s74, %s76
      %p80 = scmp.eq.s32.totalorder %s19, 0
      %p81 = por %p79, %p80
      %p82 = scmp.ne.s32.totalorder %s74, %s76
      %p83 = scmp.eq.s32.totalorder %s24, 1
      %p84 = por %p82, %p83
      %p85 = scmp.ne.s32.totalorder %s76, %s77
      %p86 = scmp.eq.s32.totalorder %s24, 0
      %p87 = por %p85, %p86
      %p88 = scmp.ne.s32.totalorder %s76, %s77
      %p89 = scmp.eq.s32.totalorder %s25, 1
      %p90 = por %p88, %p89
      %p92 = scmp.ne.s32.totalorder %s77, %s91
      %p93 = scmp.eq.s32.totalorder %s25, 0
      %p94 = por %p92, %p93
      %s96 = sadd.s32 %s95, 1
      %p99 = scmp.eq.s32.totalorder %s19, 1
      %p100 = scmp.ne.s32.totalorder %s95, %s97
      %p101 = scmp.eq.s32.totalorder %s19, 0
      %p102 = por %p100, %p101
      %p103 = scmp.ne.s32.totalorder %s95, %s97
      %p104 = scmp.eq.s32.totalorder %s24, 1
      %p105 = por %p103, %p104
      %p106 = scmp.ne.s32.totalorder %s97, %s98
      %p107 = scmp.eq.s32.totalorder %s24, 0
      %p108 = por %p106, %p107
      %p109 = scmp.ne.s32.totalorder %s97, %s98
      %p110 = scmp.eq.s32.totalorder %s25, 1
      %p111 = por %p109, %p110
      %p113 = scmp.ne.s32.totalorder %s98, %s112
      %p114 = scmp.eq.s32.totalorder %s25, 0
      %p115 = por %p113, %p114
      %s117 = sadd.s32 %s116, 1
      %p120 = scmp.eq.s32.totalorder %s19, 1
      %p121 = scmp.ne.s32.totalorder %s116, %s118
      %p122 = scmp.eq.s32.totalorder %s19, 0
      %p123 = por %p121, %p122
      %p124 = scmp.ne.s32.totalorder %s116, %s118
      %p125 = scmp.eq.s32.totalorder %s24, 1
      %p126 = por %p124, %p125
      %p127 = scmp.ne.s32.totalorder %s118, %s119
      %p128 = scmp.eq.s32.totalorder %s24, 0
      %p129 = por %p127, %p128
      %p130 = scmp.ne.s32.totalorder %s118, %s119
      %p131 = scmp.eq.s32.totalorder %s25, 1
      %p132 = por %p130, %p131
      %p134 = scmp.ne.s32.totalorder %s119, %s133
      %p135 = scmp.eq.s32.totalorder %s25, 0
      %p136 = por %p134, %p135
      %s138 = sadd.s32 %s137, 1
      %p141 = scmp.eq.s32.totalorder %s19, 1
      %p142 = scmp.ne.s32.totalorder %s137, %s139
      %p143 = scmp.eq.s32.totalorder %s19, 0
      %p144 = por %p142, %p143
      %p145 = scmp.ne.s32.totalorder %s137, %s139
      %p146 = scmp.eq.s32.totalorder %s24, 1
      %p147 = por %p145, %p146
      %p148 = scmp.ne.s32.totalorder %s139, %s140
      %p149 = scmp.eq.s32.totalorder %s24, 0
      %p150 = por %p148, %p149
      %p151 = scmp.ne.s32.totalorder %s139, %s140
      %p152 = scmp.eq.s32.totalorder %s25, 1
      %p153 = por %p151, %p152
      %p155 = scmp.ne.s32.totalorder %s140, %s154
      %p156 = scmp.eq.s32.totalorder %s25, 0
      %p157 = por %p155, %p156
      %s159 = sadd.s32 %s158, 1
      %p162 = scmp.eq.s32.totalorder %s19, 1
      %p163 = scmp.ne.s32.totalorder %s158, %s160
      %p164 = scmp.eq.s32.totalorder %s19, 0
      %p165 = por %p163, %p164
      %p166 = scmp.ne.s32.totalorder %s158, %s160
      %p167 = scmp.eq.s32.totalorder %s24, 1
      %p168 = por %p166, %p167
      %p169 = scmp.ne.s32.totalorder %s160, %s161
      %p170 = scmp.eq.s32.totalorder %s24, 0
      %p171 = por %p169, %p170
      %p172 = scmp.ne.s32.totalorder %s160, %s161
      %p173 = scmp.eq.s32.totalorder %s25, 1
      %p174 = por %p172, %p173
      %p176 = scmp.ne.s32.totalorder %s161, %s175
      %p177 = scmp.eq.s32.totalorder %s25, 0
      %p178 = por %p176, %p177
      %s180 = sadd.s32 %s179, 1
      %p183 = scmp.eq.s32.totalorder %s19, 1
      %p184 = scmp.ne.s32.totalorder %s179, %s181
      %p185 = scmp.eq.s32.totalorder %s19, 0
      %p186 = por %p184, %p185
      %p187 = scmp.ne.s32.totalorder %s179, %s181
      %p188 = scmp.eq.s32.totalorder %s24, 1
      %p189 = por %p187, %p188
      %p190 = scmp.ne.s32.totalorder %s181, %s182
      %p191 = scmp.eq.s32.totalorder %s24, 0
      %p192 = por %p190, %p191
      %p193 = scmp.ne.s32.totalorder %s181, %s182
      %p194 = scmp.eq.s32.totalorder %s25, 1
      %p195 = por %p193, %p194
      %p197 = scmp.ne.s32.totalorder %s182, %s196
      %p198 = scmp.eq.s32.totalorder %s25, 0
      %p199 = por %p197, %p198
      %s200 = ssub.s32 %s19, %s26
      %p201 = scmp.eq.s32.totalorder %s200, 0
      %s203 = sadd.s32 %s202, 1
      %s204 = scalar_select %p201, %s202, %s203
      %p207 = pneg %p201
      %p208 = scmp.eq.s32.totalorder %s19, 1
      %p209 = por %p207, %p208
      %p210 = scmp.ne.s32.totalorder %s202, %s205
      %p211 = scmp.eq.s32.totalorder %s19, 0
      %p212 = por %p210, %p211
      %p213 = scmp.ne.s32.totalorder %s202, %s205
      %p214 = scmp.eq.s32.totalorder %s24, 1
      %p215 = por %p213, %p214
      %p216 = scmp.ne.s32.totalorder %s205, %s206
      %p217 = scmp.eq.s32.totalorder %s24, 0
      %p218 = por %p216, %p217
      %p219 = scmp.ne.s32.totalorder %s205, %s206
      %p220 = scmp.eq.s32.totalorder %s25, 1
      %p221 = por %p219, %p220
      %p223 = scmp.ne.s32.totalorder %s206, %s222
      %p224 = scmp.eq.s32.totalorder %s25, 0
      %p225 = por %p223, %p224
      %s226 = ssub.s32 %s19, %s26
      %p227 = scmp.eq.s32.totalorder %s226, 0
      %s229 = sadd.s32 %s228, 1
      %s230 = scalar_select %p227, %s228, %s229
      %p233 = pneg %p227
      %p234 = scmp.eq.s32.totalorder %s19, 1
      %p235 = por %p233, %p234
      %p236 = scmp.ne.s32.totalorder %s228, %s231
      %p237 = scmp.eq.s32.totalorder %s19, 0
      %p238 = por %p236, %p237
      %p239 = scmp.ne.s32.totalorder %s228, %s231
      %p240 = scmp.eq.s32.totalorder %s24, 1
      %p241 = por %p239, %p240
      %p242 = scmp.ne.s32.totalorder %s231, %s232
      %p243 = scmp.eq.s32.totalorder %s24, 0
      %p244 = por %p242, %p243
      %p245 = scmp.ne.s32.totalorder %s231, %s232
      %p246 = scmp.eq.s32.totalorder %s25, 1
      %p247 = por %p245, %p246
      %p249 = scmp.ne.s32.totalorder %s232, %s248
      %p250 = scmp.eq.s32.totalorder %s25, 0
      %p251 = por %p249, %p250
      %p252 = scmp.le.s32.totalorder 1, %s19
      %p253 = scmp.lt.s32.totalorder %s19, 3
      %p254 = pnand %p252, %p253
      %p255 = pneg %p254
      // Predicated region
      $region9: #{tpu_custom_call.1} parent=5 // pred_check
        _
      $region10: #{tpu_custom_call.1} parent=5 // pred_check_branch
        %257 = sbr.rel (%p254) target = $region12
      $region11: #{tpu_custom_call.1} parent=5 // pred_region
        %s258 = ssub.s32 %s19, 1
        // Predicated region
        $region13: #{tpu_custom_call.1} parent=11 // pred_check
          %p259 = pneg %p66
        $region14: #{tpu_custom_call.1} parent=11 // pred_check_branch
          %261 = sbr.rel (%p259) target = $region16
        $region15: #{tpu_custom_call.1} parent=11 // pred_region
          _
        $region16: #{tpu_custom_call.1} parent=11 // pred_fallthru
          _
        // Predicated region
        $region17: #{tpu_custom_call.1} parent=11 // pred_check
          %p262 = pneg %p87
        $region18: #{tpu_custom_call.1} parent=11 // pred_check_branch
          %264 = sbr.rel (%p262) target = $region20
        $region19: #{tpu_custom_call.1} parent=11 // pred_region
          _
        $region20: #{tpu_custom_call.1} parent=11 // pred_fallthru
          _
        // Predicated region
        $region21: #{tpu_custom_call.1} parent=11 // pred_check
          %p265 = pneg %p108
        $region22: #{tpu_custom_call.1} parent=11 // pred_check_branch
          %267 = sbr.rel (%p265) target = $region24
        $region23: #{tpu_custom_call.1} parent=11 // pred_region
          _
        $region24: #{tpu_custom_call.1} parent=11 // pred_fallthru
          _
        // Predicated region
        $region25: #{tpu_custom_call.1} parent=11 // pred_check
          %p268 = pneg %p129
        $region26: #{tpu_custom_call.1} parent=11 // pred_check_branch
          %270 = sbr.rel (%p268) target = $region28
        $region27: #{tpu_custom_call.1} parent=11 // pred_region
          _
        $region28: #{tpu_custom_call.1} parent=11 // pred_fallthru
          _
        // Predicated region
        $region29: #{tpu_custom_call.1} parent=11 // pred_check
          %p271 = pneg %p150
        $region30: #{tpu_custom_call.1} parent=11 // pred_check_branch
          %273 = sbr.rel (%p271) target = $region32
        $region31: #{tpu_custom_call.1} parent=11 // pred_region
          _
        $region32: #{tpu_custom_call.1} parent=11 // pred_fallthru
          _
        // Predicated region
        $region33: #{tpu_custom_call.1} parent=11 // pred_check
          %p274 = pneg %p171
        $region34: #{tpu_custom_call.1} parent=11 // pred_check_branch
          %276 = sbr.rel (%p274) target = $region36
        $region35: #{tpu_custom_call.1} parent=11 // pred_region
          _
        $region36: #{tpu_custom_call.1} parent=11 // pred_fallthru
          _
        // Predicated region
        $region37: #{tpu_custom_call.1} parent=11 // pred_check
          %p277 = pneg %p192
        $region38: #{tpu_custom_call.1} parent=11 // pred_check_branch
          %279 = sbr.rel (%p277) target = $region40
        $region39: #{tpu_custom_call.1} parent=11 // pred_region
          _
        $region40: #{tpu_custom_call.1} parent=11 // pred_fallthru
          _
      $region12: #{tpu_custom_call.1} parent=5 // pred_fallthru
        _
      %p280 = scmp.lt.s32.totalorder %s19, 2
      // Predicated region
      $region41: #{tpu_custom_call.1} parent=5 // pred_check
        %p281 = pneg %p280
      $region42: #{tpu_custom_call.1} parent=5 // pred_check_branch
        %283 = sbr.rel (%p281) target = $region44
      $region43: #{tpu_custom_call.1} parent=5 // pred_region
        // Predicated region
        $region45: #{tpu_custom_call.1} parent=43 // pred_check
          %p284 = pneg %p39
        $region46: #{tpu_custom_call.1} parent=43 // pred_check_branch
          %286 = sbr.rel (%p284) target = $region48
        $region47: #{tpu_custom_call.1} parent=43 // pred_region
          %s287 = smul.u32 2, %s19
          %p288 = scmp.lt.s32.totalorder %s287, 3
          %s289 = scalar_select %p288, %s287, 3
          %s290 = smul.addr %s289, 3
          %s291 = smul.addr %s290, 8
          %s292 = scalar_lea.vmem %s0, %s291
          %s293 = smul.u32 2, %s19
        $region48: #{tpu_custom_call.1} parent=43 // pred_fallthru
          _
      $region44: #{tpu_custom_call.1} parent=5 // pred_fallthru
        _
      %p294 = scmp.le.s32.totalorder 1, %s19
      %p295 = scmp.lt.s32.totalorder %s19, 3
      %p296 = pnand %p294, %p295
      %p297 = pneg %p296
      // Predicated region
      $region49: #{tpu_custom_call.1} parent=5 // pred_check
        _
      $region50: #{tpu_custom_call.1} parent=5 // pred_check_branch
        %299 = sbr.rel (%p296) target = $region52
      $region51: #{tpu_custom_call.1} parent=5 // pred_region
        %s300 = ssub.s32 %s19, 1
        %s301 = smul.u32 2, %s24
        %p302 = scmp.lt.s32.totalorder %s301, 3
        %s303 = scalar_select %p302, %s301, 3
        %s304 = smul.addr %s303, 3
        %s305 = smul.addr %s304, 8
        %s306 = scalar_lea.vmem %s0, %s305
        %p307 = pneg %p45
        %p308 = pneg %p42
        %p309 = pneg %p66
        %p310 = pneg %p63
        %p311 = pneg %p87
        %p312 = pneg %p84
        %p313 = pneg %p108
        %p314 = pneg %p105
        %p315 = pneg %p129
        %p316 = pneg %p126
        %p317 = pneg %p150
        %p318 = pneg %p147
        %p319 = pneg %p171
        %p320 = pneg %p168
        %p321 = pneg %p192
        %p322 = pneg %p189
        %p323 = pneg %p218
        %p324 = pneg %p215
        %s325 = smul.u32 2, %s24
        %p326 = scmp.lt.s32.totalorder %s325, 3
        %s327 = scalar_select %p326, %s325, 3
        %s328 = smul.addr %s327, 3
        %s329 = smul.addr %s328, 8
        %s330 = scalar_lea.vmem %s8, %s329
        %p331 = pneg %p244
        %p332 = pneg %p241
        %s333 = sand.u32 %s231, 1
        %s334 = scalar_lea.sflag [#allocation3], %s333
        %s335 = sand.u32 %s231, 1
        %s336 = smul.addr %s335, 4
        %s337 = scalar_lea.vmem [#allocation2], %s336
        %s338 = smul.u32 2, %s24
        %p339 = scmp.lt.s32.totalorder %s338, 3
        %s340 = scalar_select %p339, %s338, 3
        %s341 = smul.addr %s340, 3
        %s342 = smul.addr %s341, 8
        %s343 = scalar_lea.vmem %s0, %s342
        %s344 = smul.u32 2, %s24
        %s345 = smul.u32 2, %s24
        %p346 = scmp.lt.s32.totalorder %s345, 3
        %s347 = scalar_select %p346, %s345, 3
        %s348 = smul.addr %s347, 3
        %s349 = smul.addr %s348, 8
        %s350 = scalar_lea.vmem %s8, %s349
        %s351 = smul.u32 2, %s24
        %s352 = smul.u32 2, %s24
        %v354 = vld [vmem:[%s343] sm:$0xff]
        %v355 = vld [vmem:[%s343 + $0x8] sm:$0xff]
        %v356 = vld [vmem:[%s343 + $0x10] sm:$0x1]
        %v357 = vld [vmem:[%s343 + $0x18] sm:$0xff]
        %v358 = vld [vmem:[%s343 + $0x20] sm:$0xff]
        %v359 = vld [vmem:[%s343 + $0x28] sm:$0x1]
        %v360 = vperm.slane %v354, 0
        %v361 = vperm.slane %v357, 0
        %v362 = vmul.f32 %v354, %v360
        %v363 = vmul.f32 %v355, %v360
        %v364 = vmul.f32 %v356, %v360
        %v365 = vmul.f32 %v357, %v361
        %v366 = vmul.f32 %v358, %v361
        %v367 = vmul.f32 %v359, %v361
        %vm368 = vcmask 261121
        %v369 = vsel %vm368, %v362, 0.0
        %370 = vadd.xlane.f32.xlu0 %v369
        %v371 = vpop.xlane.xlu0 %370
        %vm372 = vcmask 261120
        %v373 = vsel %vm372, %v363, 0.0
        %374 = vadd.xlane.f32.xlu0 %v373
        %v375 = vpop.xlane.xlu0 %374
        %vm376 = vcmask 253952
        %v377 = vsel %vm376, %v364, 0.0
        %378 = vadd.xlane.f32.xlu0 %v377
        %v379 = vpop.xlane.xlu0 %378
        %v380 = vsel %vm368, %v365, 0.0
        %381 = vadd.xlane.f32.xlu0 %v380
        %v382 = vpop.xlane.xlu0 %381
        %v383 = vsel %vm372, %v366, 0.0
        %384 = vadd.xlane.f32.xlu0 %v383
        %v385 = vpop.xlane.xlu0 %384
        %v386 = vsel %vm376, %v367, 0.0
        %387 = vadd.xlane.f32.xlu0 %v386
        %v388 = vpop.xlane.xlu0 %387
        %v389 = vxor.u32 %v371, 2147483648
        %v390 = vxor.u32 %v375, 2147483648
        %v391 = vxor.u32 %v379, 2147483648
        %v392 = vxor.u32 %v382, 2147483648
        %v393 = vxor.u32 %v385, 2147483648
        %v394 = vxor.u32 %v388, 2147483648
        %v395 = vmul.f32 %v389, 1.442695
        %v396 = vpow.pop %v395
        %v397 = vmul.f32 %v390, 1.442695
        %v398 = vpow.pop %v397
        %v399 = vmul.f32 %v391, 1.442695
        %v400 = vpow.pop %v399
        %v401 = vmul.f32 %v392, 1.442695
        %v402 = vpow.pop %v401
        %v403 = vmul.f32 %v393, 1.442695
        %v404 = vpow.pop %v403
        %v405 = vmul.f32 %v394, 1.442695
        %v406 = vpow.pop %v405
        %v407 = vadd.f32 %v396, 1.0
        %v408 = vadd.f32 %v398, 1.0
        %v409 = vadd.f32 %v400, 1.0
        %v410 = vadd.f32 %v402, 1.0
        %v411 = vadd.f32 %v404, 1.0
        %v412 = vadd.f32 %v406, 1.0
        %v413 = vrcp.pop %v407
        %v414 = vmul.f32 %v407, %v413
        %v415 = vsub.f32 1.0, %v414
        %v416 = vmul.f32 %v413, %v415
        %v417 = vadd.f32 %v413, %v416
        %vm418 = vweird.f32 %v407
        %vm419 = vweird.f32 %v413
        %vm420 = vmor %vm418, %vm419
        %v421 = vsel %vm420, %v413, %v417
        %v422 = vand.u32 2147483647, %v407
        %vm423 = vcmp.eq.f32.partialorder %v422, 8.507059e+37
        %v424 = vand.u32 %v407, 2147483648
        %v425 = vor.u32 1.1754944e-38, %v424
        %v426 = vsel %vm423, %v425, %v421
        %v427 = vmul.f32 1.0, %v426
        %v428 = vrcp.pop %v408
        %v429 = vmul.f32 %v408, %v428
        %v430 = vsub.f32 1.0, %v429
        %v431 = vmul.f32 %v428, %v430
        %v432 = vadd.f32 %v428, %v431
        %vm433 = vweird.f32 %v408
        %vm434 = vweird.f32 %v428
        %vm435 = vmor %vm433, %vm434
        %v436 = vsel %vm435, %v428, %v432
        %v437 = vand.u32 2147483647, %v408
        %vm438 = vcmp.eq.f32.partialorder %v437, 8.507059e+37
        %v439 = vand.u32 %v408, 2147483648
        %v440 = vor.u32 1.1754944e-38, %v439
        %v441 = vsel %vm438, %v440, %v436
        %v442 = vmul.f32 1.0, %v441
        %v443 = vrcp.pop %v409
        %v444 = vmul.f32 %v409, %v443
        %v445 = vsub.f32 1.0, %v444
        %v446 = vmul.f32 %v443, %v445
        %v447 = vadd.f32 %v443, %v446
        %vm448 = vweird.f32 %v409
        %vm449 = vweird.f32 %v443
        %vm450 = vmor %vm448, %vm449
        %v451 = vsel %vm450, %v443, %v447
        %v452 = vand.u32 2147483647, %v409
        %vm453 = vcmp.eq.f32.partialorder %v452, 8.507059e+37
        %v454 = vand.u32 %v409, 2147483648
        %v455 = vor.u32 1.1754944e-38, %v454
        %v456 = vsel %vm453, %v455, %v451
        %v457 = vmul.f32 1.0, %v456
        %v458 = vrcp.pop %v410
        %v459 = vmul.f32 %v410, %v458
        %v460 = vsub.f32 1.0, %v459
        %v461 = vmul.f32 %v458, %v460
        %v462 = vadd.f32 %v458, %v461
        %vm463 = vweird.f32 %v410
        %vm464 = vweird.f32 %v458
        %vm465 = vmor %vm463, %vm464
        %v466 = vsel %vm465, %v458, %v462
        %v467 = vand.u32 2147483647, %v410
        %vm468 = vcmp.eq.f32.partialorder %v467, 8.507059e+37
        %v469 = vand.u32 %v410, 2147483648
        %v470 = vor.u32 1.1754944e-38, %v469
        %v471 = vsel %vm468, %v470, %v466
        %v472 = vmul.f32 1.0, %v471
        %v473 = vrcp.pop %v411
        %v474 = vmul.f32 %v411, %v473
        %v475 = vsub.f32 1.0, %v474
        %v476 = vmul.f32 %v473, %v475
        %v477 = vadd.f32 %v473, %v476
        %vm478 = vweird.f32 %v411
        %vm479 = vweird.f32 %v473
        %vm480 = vmor %vm478, %vm479
        %v481 = vsel %vm480, %v473, %v477
        %v482 = vand.u32 2147483647, %v411
        %vm483 = vcmp.eq.f32.partialorder %v482, 8.507059e+37
        %v484 = vand.u32 %v411, 2147483648
        %v485 = vor.u32 1.1754944e-38, %v484
        %v486 = vsel %vm483, %v485, %v481
        %v487 = vmul.f32 1.0, %v486
        %v488 = vrcp.pop %v412
        %v489 = vmul.f32 %v412, %v488
        %v490 = vsub.f32 1.0, %v489
        %v491 = vmul.f32 %v488, %v490
        %v492 = vadd.f32 %v488, %v491
        %vm493 = vweird.f32 %v412
        %vm494 = vweird.f32 %v488
        %vm495 = vmor %vm493, %vm494
        %v496 = vsel %vm495, %v488, %v492
        %v497 = vand.u32 2147483647, %v412
        %vm498 = vcmp.eq.f32.partialorder %v497, 8.507059e+37
        %v499 = vand.u32 %v412, 2147483648
        %v500 = vor.u32 1.1754944e-38, %v499
        %v501 = vsel %vm498, %v500, %v496
        %v502 = vmul.f32 1.0, %v501
        %vm503 = vcmp.gt.f32.partialorder %v427, 0.5
        %vm504 = vcmp.gt.f32.partialorder %v442, 0.5
        %vm505 = vcmp.gt.f32.partialorder %v457, 0.5
        %vm506 = vcmp.gt.f32.partialorder %v472, 0.5
        %vm507 = vcmp.gt.f32.partialorder %v487, 0.5
        %vm508 = vcmp.gt.f32.partialorder %v502, 0.5
        %v509 = vsel %vm503, 1, 0
        %v510 = vsel %vm504, 1, 0
        %v511 = vsel %vm505, 1, 0
        %v512 = vsel %vm506, 1, 0
        %v513 = vsel %vm507, 1, 0
        %v514 = vsel %vm508, 1, 0
        %v515 = vcvt.s32.f32 %v509
        %v516 = vcvt.s32.f32 %v510
        %v517 = vcvt.s32.f32 %v511
        %v518 = vcvt.s32.f32 %v512
        %v519 = vcvt.s32.f32 %v513
        %v520 = vcvt.s32.f32 %v514
        %vm527 = vcmask 1046528
        %v528 = vrot.slane %v515, 1
        %v529 = vrot.slane %v516, 1
        %v530 = vsel %vm527, %v528, %v529
        %v531 = vrot.slane %v517, 1
        %v532 = vsel %vm527, %v529, %v531
        %v533 = vrot.slane %v518, 1
        %v534 = vrot.slane %v519, 1
        %v535 = vsel %vm527, %v533, %v534
        %v536 = vrot.slane %v520, 1
        %v537 = vsel %vm527, %v534, %v536
        %v542 = vadd.f32 %v530, %v532
        %v543 = vrot.slane %v542, 4
        %v544 = vadd.f32 %v542, %v543
        %v545 = vrot.slane %v544, 2
        %v546 = vadd.f32 %v544, %v545
        %v547 = vrot.slane %v546, 1
        %v548 = vadd.f32 %v546, %v547
        %v549 = vadd.f32 %v535, %v537
        %v550 = vrot.slane %v549, 4
        %v551 = vadd.f32 %v549, %v550
        %v552 = vrot.slane %v551, 2
        %v553 = vadd.f32 %v551, %v552
        %v554 = vrot.slane %v553, 1
        %v555 = vadd.f32 %v553, %v554
        %vm556 = vcmp.eq.f32.partialorder %v548, 0.0
        %vm557 = vcmp.eq.f32.partialorder %v555, 0.0
        %v558 = vsel %vm556, 1, 0
        %v559 = vsel %vm557, 1, 0
        %vm560 = vcmp.eq.s32.totalorder %v558, 1
        %vm561 = vcmp.eq.s32.totalorder %v559, 1
        %v562 = vsel %vm560, 1.0, %v515
        %v563 = vsel %vm560, 1.0, %v516
        %v564 = vsel %vm560, 1.0, %v517
        %v565 = vsel %vm561, 1.0, %v518
        %v566 = vsel %vm561, 1.0, %v519
        %v567 = vsel %vm561, 1.0, %v520
        %v574 = vrot.slane %v562, 1
        %v575 = vrot.slane %v563, 1
        %v576 = vsel %vm527, %v574, %v575
        %v577 = vrot.slane %v564, 1
        %v578 = vsel %vm527, %v575, %v577
        %v579 = vrot.slane %v565, 1
        %v580 = vrot.slane %v566, 1
        %v581 = vsel %vm527, %v579, %v580
        %v582 = vrot.slane %v567, 1
        %v583 = vsel %vm527, %v580, %v582
        %588 = vxpose.xlu0.b32.start [1/16] %v576, 128
        %589 = vxpose.xlu0.b32.cont [2/16] %v578, 128
        %590 = vxpose.xlu0.b32.cont [3/16] 0.0, 128
        %591 = vxpose.xlu0.b32.cont [4/16] 0.0, 128
        %592 = vxpose.xlu0.b32.cont [5/16] 0.0, 128
        %593 = vxpose.xlu0.b32.cont [6/16] 0.0, 128
        %594 = vxpose.xlu0.b32.cont [7/16] 0.0, 128
        %595 = vxpose.xlu0.b32.cont [8/16] 0.0, 128
        %596 = vxpose.xlu0.b32.cont [9/16] 0.0, 128
        %597 = vxpose.xlu0.b32.cont [10/16] 0.0, 128
        %598 = vxpose.xlu0.b32.cont [11/16] 0.0, 128
        %599 = vxpose.xlu0.b32.cont [12/16] 0.0, 128
        %600 = vxpose.xlu0.b32.cont [13/16] 0.0, 128
        %601 = vxpose.xlu0.b32.cont [14/16] 0.0, 128
        %602 = vxpose.xlu0.b32.cont [15/16] 0.0, 128
        %603 = vxpose.xlu0.b32.end [16/16] 0.0, 128
        %v604 = vpop.trf.xlu0
        %v605 = vpop.trf.xlu0
        %v606 = vpop.trf.xlu0
        %v607 = vpop.trf.xlu0
        %v608 = vpop.trf.xlu0
        %v609 = vpop.trf.xlu0
        %v610 = vpop.trf.xlu0
        %v611 = vpop.trf.xlu0
        %v612 = vpop.trf.xlu0
        %v613 = vpop.trf.xlu0
        %v614 = vpop.trf.xlu0
        %v615 = vpop.trf.xlu0
        %v616 = vpop.trf.xlu0
        %v617 = vpop.trf.xlu0
        %v618 = vpop.trf.xlu0
        %v619 = vpop.trf.xlu0
        %620 = vxpose.xlu0.b32.start [1/16] %v581, 128
        %621 = vxpose.xlu0.b32.cont [2/16] %v583, 128
        %622 = vxpose.xlu0.b32.cont [3/16] 0.0, 128
        %623 = vxpose.xlu0.b32.cont [4/16] 0.0, 128
        %624 = vxpose.xlu0.b32.cont [5/16] 0.0, 128
        %625 = vxpose.xlu0.b32.cont [6/16] 0.0, 128
        %626 = vxpose.xlu0.b32.cont [7/16] 0.0, 128
        %627 = vxpose.xlu0.b32.cont [8/16] 0.0, 128
        %628 = vxpose.xlu0.b32.cont [9/16] 0.0, 128
        %629 = vxpose.xlu0.b32.cont [10/16] 0.0, 128
        %630 = vxpose.xlu0.b32.cont [11/16] 0.0, 128
        %631 = vxpose.xlu0.b32.cont [12/16] 0.0, 128
        %632 = vxpose.xlu0.b32.cont [13/16] 0.0, 128
        %633 = vxpose.xlu0.b32.cont [14/16] 0.0, 128
        %634 = vxpose.xlu0.b32.cont [15/16] 0.0, 128
        %635 = vxpose.xlu0.b32.end [16/16] 0.0, 128
        %v636 = vpop.trf.xlu0
        %v637 = vpop.trf.xlu0
        %v638 = vpop.trf.xlu0
        %v639 = vpop.trf.xlu0
        %v640 = vpop.trf.xlu0
        %v641 = vpop.trf.xlu0
        %v642 = vpop.trf.xlu0
        %v643 = vpop.trf.xlu0
        %v644 = vpop.trf.xlu0
        %v645 = vpop.trf.xlu0
        %v646 = vpop.trf.xlu0
        %v647 = vpop.trf.xlu0
        %v648 = vpop.trf.xlu0
        %v649 = vpop.trf.xlu0
        %v650 = vpop.trf.xlu0
        %v651 = vpop.trf.xlu0
        %v658 = vrot.slane %v427, 1
        %v659 = vrot.slane %v442, 1
        %v660 = vsel %vm527, %v658, %v659
        %v661 = vrot.slane %v457, 1
        %v662 = vsel %vm527, %v659, %v661
        %v663 = vrot.slane %v472, 1
        %v664 = vrot.slane %v487, 1
        %v665 = vsel %vm527, %v663, %v664
        %v666 = vrot.slane %v502, 1
        %v667 = vsel %vm527, %v664, %v666
        %672 = vxpose.xlu0.b32.start [1/16] %v660, 128
        %673 = vxpose.xlu0.b32.cont [2/16] %v662, 128
        %674 = vxpose.xlu0.b32.cont [3/16] 0.0, 128
        %675 = vxpose.xlu0.b32.cont [4/16] 0.0, 128
        %676 = vxpose.xlu0.b32.cont [5/16] 0.0, 128
        %677 = vxpose.xlu0.b32.cont [6/16] 0.0, 128
        %678 = vxpose.xlu0.b32.cont [7/16] 0.0, 128
        %679 = vxpose.xlu0.b32.cont [8/16] 0.0, 128
        %680 = vxpose.xlu0.b32.cont [9/16] 0.0, 128
        %681 = vxpose.xlu0.b32.cont [10/16] 0.0, 128
        %682 = vxpose.xlu0.b32.cont [11/16] 0.0, 128
        %683 = vxpose.xlu0.b32.cont [12/16] 0.0, 128
        %684 = vxpose.xlu0.b32.cont [13/16] 0.0, 128
        %685 = vxpose.xlu0.b32.cont [14/16] 0.0, 128
        %686 = vxpose.xlu0.b32.cont [15/16] 0.0, 128
        %687 = vxpose.xlu0.b32.end [16/16] 0.0, 128
        %v688 = vpop.trf.xlu0
        %v689 = vpop.trf.xlu0
        %v690 = vpop.trf.xlu0
        %v691 = vpop.trf.xlu0
        %v692 = vpop.trf.xlu0
        %v693 = vpop.trf.xlu0
        %v694 = vpop.trf.xlu0
        %v695 = vpop.trf.xlu0
        %v696 = vpop.trf.xlu0
        %v697 = vpop.trf.xlu0
        %v698 = vpop.trf.xlu0
        %v699 = vpop.trf.xlu0
        %v700 = vpop.trf.xlu0
        %v701 = vpop.trf.xlu0
        %v702 = vpop.trf.xlu0
        %v703 = vpop.trf.xlu0
        %704 = vxpose.xlu0.b32.start [1/16] %v665, 128
        %705 = vxpose.xlu0.b32.cont [2/16] %v667, 128
        %706 = vxpose.xlu0.b32.cont [3/16] 0.0, 128
        %707 = vxpose.xlu0.b32.cont [4/16] 0.0, 128
        %708 = vxpose.xlu0.b32.cont [5/16] 0.0, 128
        %709 = vxpose.xlu0.b32.cont [6/16] 0.0, 128
        %710 = vxpose.xlu0.b32.cont [7/16] 0.0, 128
        %711 = vxpose.xlu0.b32.cont [8/16] 0.0, 128
        %712 = vxpose.xlu0.b32.cont [9/16] 0.0, 128
        %713 = vxpose.xlu0.b32.cont [10/16] 0.0, 128
        %714 = vxpose.xlu0.b32.cont [11/16] 0.0, 128
        %715 = vxpose.xlu0.b32.cont [12/16] 0.0, 128
        %716 = vxpose.xlu0.b32.cont [13/16] 0.0, 128
        %717 = vxpose.xlu0.b32.cont [14/16] 0.0, 128
        %718 = vxpose.xlu0.b32.cont [15/16] 0.0, 128
        %719 = vxpose.xlu0.b32.end [16/16] 0.0, 128
        %v720 = vpop.trf.xlu0
        %v721 = vpop.trf.xlu0
        %v722 = vpop.trf.xlu0
        %v723 = vpop.trf.xlu0
        %v724 = vpop.trf.xlu0
        %v725 = vpop.trf.xlu0
        %v726 = vpop.trf.xlu0
        %v727 = vpop.trf.xlu0
        %v728 = vpop.trf.xlu0
        %v729 = vpop.trf.xlu0
        %v730 = vpop.trf.xlu0
        %v731 = vpop.trf.xlu0
        %v732 = vpop.trf.xlu0
        %v733 = vpop.trf.xlu0
        %v734 = vpop.trf.xlu0
        %v735 = vpop.trf.xlu0
        %v738 = vrot.slane %v688, 7
        %v739 = vrot.slane %v720, 7
        %vm742 = vcmask 1040384
        %v743 = vsel %vm742, %v604, %v738
        %v744 = vsel %vm742, %v636, %v739
        %vm745 = vcmask 123904
        %746 = vst.msk [vmem:[%s337] sm:$0x3] %vm745, %v743
        %747 = vst.msk [vmem:[%s337 + $0x2] sm:$0x3] %vm745, %v744
        %v748 = vmul.f32 %v371, %v562
        %v749 = vmul.f32 %v375, %v563
        %v750 = vmul.f32 %v379, %v564
        %v751 = vmul.f32 %v382, %v565
        %v752 = vmul.f32 %v385, %v566
        %v753 = vmul.f32 %v388, %v567
        %v754 = vmul.f32 %v354, %v748
        %v755 = vmul.f32 %v355, %v749
        %v756 = vmul.f32 %v356, %v750
        %v757 = vmul.f32 %v357, %v751
        %v758 = vmul.f32 %v358, %v752
        %v759 = vmul.f32 %v359, %v753
        %v766 = vrot.slane %v754, 1
        %v767 = vrot.slane %v755, 1
        %v768 = vsel %vm527, %v766, %v767
        %v769 = vrot.slane %v756, 1
        %v770 = vsel %vm527, %v767, %v769
        %v771 = vrot.slane %v757, 1
        %v772 = vrot.slane %v758, 1
        %v773 = vsel %vm527, %v771, %v772
        %v774 = vrot.slane %v759, 1
        %v775 = vsel %vm527, %v772, %v774
        %v780 = vsel %vm372, %v768, 0.0
        %v781 = vsel %vm372, %v770, 0.0
        %v782 = vadd.f32 %v780, %v781
        %v783 = vrot.slane %v782, 4
        %v784 = vadd.f32 %v782, %v783
        %v785 = vrot.slane %v784, 2
        %v786 = vadd.f32 %v784, %v785
        %v787 = vrot.slane %v786, 1
        %v788 = vadd.f32 %v786, %v787
        %v789 = vsel %vm372, %v773, 0.0
        %v790 = vsel %vm372, %v775, 0.0
        %v791 = vadd.f32 %v789, %v790
        %v792 = vrot.slane %v791, 4
        %v793 = vadd.f32 %v791, %v792
        %v794 = vrot.slane %v793, 2
        %v795 = vadd.f32 %v793, %v794
        %v796 = vrot.slane %v795, 1
        %v797 = vadd.f32 %v795, %v796
        %v798 = vsub.f32 1.0, %v562
        %v799 = vsub.f32 1.0, %v563
        %v800 = vsub.f32 1.0, %v564
        %v801 = vsub.f32 1.0, %v565
        %v802 = vsub.f32 1.0, %v566
        %v803 = vsub.f32 1.0, %v567
        %v804 = vmul.f32 %v371, %v798
        %v805 = vmul.f32 %v375, %v799
        %v806 = vmul.f32 %v379, %v800
        %v807 = vmul.f32 %v382, %v801
        %v808 = vmul.f32 %v385, %v802
        %v809 = vmul.f32 %v388, %v803
        %v810 = vmul.f32 %v354, %v804
        %v811 = vmul.f32 %v355, %v805
        %v812 = vmul.f32 %v356, %v806
        %v813 = vmul.f32 %v357, %v807
        %v814 = vmul.f32 %v358, %v808
        %v815 = vmul.f32 %v359, %v809
        %v822 = vrot.slane %v810, 1
        %v823 = vrot.slane %v811, 1
        %v824 = vsel %vm527, %v822, %v823
        %v825 = vrot.slane %v812, 1
        %v826 = vsel %vm527, %v823, %v825
        %v827 = vrot.slane %v813, 1
        %v828 = vrot.slane %v814, 1
        %v829 = vsel %vm527, %v827, %v828
        %v830 = vrot.slane %v815, 1
        %v831 = vsel %vm527, %v828, %v830
        %v836 = vsel %vm372, %v824, 0.0
        %v837 = vsel %vm372, %v826, 0.0
        %v838 = vadd.f32 %v836, %v837
        %v839 = vrot.slane %v838, 4
        %v840 = vadd.f32 %v838, %v839
        %v841 = vrot.slane %v840, 2
        %v842 = vadd.f32 %v840, %v841
        %v843 = vrot.slane %v842, 1
        %v844 = vadd.f32 %v842, %v843
        %v845 = vsel %vm372, %v829, 0.0
        %v846 = vsel %vm372, %v831, 0.0
        %v847 = vadd.f32 %v845, %v846
        %v848 = vrot.slane %v847, 4
        %v849 = vadd.f32 %v847, %v848
        %v850 = vrot.slane %v849, 2
        %v851 = vadd.f32 %v849, %v850
        %v852 = vrot.slane %v851, 1
        %v853 = vadd.f32 %v851, %v852
        %v854 = vsel %vm742, %v354, %v788
        %v855 = vsel %vm742, %v357, %v797
        %vm856 = vcmask 1041408
        %v857 = vsel %vm856, %v854, %v844
        %v858 = vsel %vm856, %v855, %v853
        %vm859 = vcmask 256000
        %v860 = vsel %vm859, %v857, 0.0
        %861 = vadd.xlane.f32.xlu0 %v860
        %v862 = vpop.xlane.xlu0 %861
        %v863 = vsel %vm859, %v858, 0.0
        %864 = vadd.xlane.f32.xlu0 %v863
        %v865 = vpop.xlane.xlu0 %864
        %v866 = vrcp.pop 32.0
        %v867 = vmul.f32 32.0, %v866
        %v868 = vsub.f32 1.0, %v867
        %v869 = vmul.f32 %v866, %v868
        %v870 = vadd.f32 %v866, %v869
        %vm871 = vweird.f32 %v866
        %v872 = vsel %vm871, %v866, %v870
        %v873 = vmul.f32 %v862, %v872
        %v874 = vmul.f32 %v865, %v872
        %v875 = vsub.f32 %v857, %v873
        %v876 = vsub.f32 %v858, %v874
        %v877 = vmul.f32 %v875, %v875
        %v878 = vmul.f32 %v876, %v876
        %v879 = vsel %vm859, %v877, 0.0
        %880 = vadd.xlane.f32.xlu0 %v879
        %v881 = vpop.xlane.xlu0 %880
        %v882 = vsel %vm859, %v878, 0.0
        %883 = vadd.xlane.f32.xlu0 %v882
        %v884 = vpop.xlane.xlu0 %883
        %v885 = vmul.f32 %v881, %v872
        %v886 = vmul.f32 %v884, %v872
        %v887 = vadd.f32 %v885, 1e-05
        %v888 = vadd.f32 %v886, 1e-05
        %v889 = vrsqrt.pop %v887
        %v890 = vmul.f32 %v889, %v887
        %v891 = vmul.f32 %v890, %v889
        %v892 = vmul.f32 0.5, %v891
        %v893 = vsub.f32 1.5, %v892
        %v894 = vmul.f32 %v889, %v893
        %vm895 = vweird.f32 %v887
        %vm896 = vweird.f32 %v889
        %vm897 = vmor %vm895, %vm896
        %v898 = vsel %vm897, %v889, %v894
        %v899 = vrsqrt.pop %v888
        %v900 = vmul.f32 %v899, %v888
        %v901 = vmul.f32 %v900, %v899
        %v902 = vmul.f32 0.5, %v901
        %v903 = vsub.f32 1.5, %v902
        %v904 = vmul.f32 %v899, %v903
        %vm905 = vweird.f32 %v888
        %vm906 = vweird.f32 %v899
        %vm907 = vmor %vm905, %vm906
        %v908 = vsel %vm907, %v899, %v904
        %v909 = vmul.f32 %v875, %v898
        %v910 = vmul.f32 %v876, %v908
        %v911 = vld [vmem:[%s6] sm:$0x1]
        %v913 = vperm.slane %v911, 0
        %v915 = vmul.f32 %v909, %v913
        %v916 = vmul.f32 %v910, %v913
        %v917 = vld [vmem:[%s7] sm:$0x1]
        %v919 = vperm.slane %v917, 0
        %v921 = vadd.f32 %v915, %v919
        %v922 = vadd.f32 %v916, %v919
        %v923 = vpack.c.bf16 %v354, %v354
        %v924 = vpack.c.bf16 %v355, %v355
        %v925 = vpack.c.bf16 %v356, %v356
        %v926 = vpack.c.bf16 %v357, %v357
        %v927 = vpack.c.bf16 %v358, %v358
        %v928 = vpack.c.bf16 %v359, %v359
        %v929 = vpack.c.bf16 %v921, %v921
        %v930 = vpack.c.bf16 %v922, %v922
        %v931 = vld [vmem:[%s1] sm:$0xf]
        %v932 = vld [vmem:[%s1 + $0x4] sm:$0xf]
        %v933 = vld [vmem:[%s1 + $0x8] sm:$0xf]
        %v934 = vld [vmem:[%s1 + $0xc] sm:$0xf]
        %v938 = vunpack.c.l.b16 %v923
        %v939 = vunpack.c.l.b16 %v924
        %v940 = vunpack.c.l.b16 %v925
        %v941 = vpack.c.b16 %v939, %v938
        %v942 = vpack.c.b16 %v940, %v940
        %v947 = vunpack.c.l.b16 %v931
        %v948 = vunpack.c.l.b16 %v932
        %v949 = vunpack.c.l.b16 %v933
        %v950 = vunpack.c.l.b16 %v934
        %v951 = vpack.c.b16 %v948, %v947
        %v952 = vpack.c.b16 %v950, %v949
        %v956 = vsel %vm372, %v941, 0
        %v959 = vsel %vm372, %v942, 0
        %961 = vmatpush.bf16.msra.mxu0 0
        %962 = vmatpush.bf16.msra.mxu0 0
        %963 = vmatpush.bf16.msra.mxu0 0
        %964 = vmatpush.bf16.msra.mxu0 0
        %965 = vmatpush.bf16.msra.mxu0 0
        %966 = vmatpush.bf16.msra.mxu0 0
        %967 = vmatpush.bf16.msra.mxu0 %v952
        %968 = vmatpush.bf16.msra.mxu0 %v951
        %969 = vmatmul.bf16.gmra.mxu0 %v956
        %v970 = vpop.f32.mrf.mxu0
        %v971 = vadd.f32 0.0, %v970
        %v972 = vpop.f32.mrf.mxu0
        %v973 = vadd.f32 0.0, %v972
        %974 = vmatmul.bf16.gmra.mxu0 %v959
        %v975 = vpop.f32.mrf.mxu0
        %v976 = vadd.f32 0.0, %v975
        %v977 = vpop.f32.mrf.mxu0
        %978 = vdwg.mxu0
        %v982 = vunpack.c.l.b16 %v926
        %v983 = vunpack.c.l.b16 %v927
        %v984 = vunpack.c.l.b16 %v928
        %v985 = vpack.c.b16 %v983, %v982
        %v986 = vpack.c.b16 %v984, %v984
        %v988 = vsel %vm372, %v985, 0
        %v991 = vsel %vm372, %v986, 0
        %993 = vmatpush.bf16.msra.mxu0 0
        %994 = vmatpush.bf16.msra.mxu0 0
        %995 = vmatpush.bf16.msra.mxu0 0
        %996 = vmatpush.bf16.msra.mxu0 0
        %997 = vmatpush.bf16.msra.mxu0 0
        %998 = vmatpush.bf16.msra.mxu0 0
        %999 = vmatpush.bf16.msra.mxu0 %v952
        %1000 = vmatpush.bf16.msra.mxu0 %v951
        %1001 = vmatmul.bf16.gmra.mxu0 %v988
        %v1002 = vpop.f32.mrf.mxu0
        %v1003 = vadd.f32 0.0, %v1002
        %v1004 = vpop.f32.mrf.mxu0
        %v1005 = vadd.f32 0.0, %v1004
        %1006 = vmatmul.bf16.gmra.mxu0 %v991
        %v1007 = vpop.f32.mrf.mxu0
        %v1008 = vadd.f32 0.0, %v1007
        %v1009 = vpop.f32.mrf.mxu0
        %1010 = vdwg.mxu0
        %v1011 = vpack.c.bf16 %v971, %v971
        %v1012 = vpack.c.bf16 %v973, %v973
        %v1013 = vpack.c.bf16 %v976, %v976
        %v1014 = vpack.c.bf16 %v1003, %v1003
        %v1015 = vpack.c.bf16 %v1005, %v1005
        %v1016 = vpack.c.bf16 %v1008, %v1008
        %v1017 = vld [vmem:[%s2] sm:$0xf]
        %v1018 = vld [vmem:[%s2 + $0x4] sm:$0xf]
        %v1019 = vld [vmem:[%s2 + $0x8] sm:$0xf]
        %v1020 = vld [vmem:[%s2 + $0xc] sm:$0xf]
        %v1025 = vunpack.c.l.b16 %v1017
        %v1026 = vunpack.c.l.b16 %v1018
        %v1027 = vunpack.c.l.b16 %v1019
        %v1028 = vunpack.c.l.b16 %v1020
        %v1029 = vpack.c.b16 %v1026, %v1025
        %v1030 = vpack.c.b16 %v1028, %v1027
        %v1034 = vsel %vm372, %v929, 0
        %1036 = vmatpush.bf16.msra.mxu0 0
        %1037 = vmatpush.bf16.msra.mxu0 0
        %1038 = vmatpush.bf16.msra.mxu0 0
        %1039 = vmatpush.bf16.msra.mxu0 0
        %1040 = vmatpush.bf16.msra.mxu0 0
        %1041 = vmatpush.bf16.msra.mxu0 0
        %1042 = vmatpush.bf16.msra.mxu0 %v1030
        %1043 = vmatpush.bf16.msra.mxu0 %v1029
        %1044 = vmatmul.bf16.gmra.mxu0 %v1034
        %v1045 = vpop.f32.mrf.mxu0
        %v1046 = vadd.f32 0.0, %v1045
        %v1047 = vpop.f32.mrf.mxu0
        %1048 = vdwg.mxu0
        %v1050 = vsel %vm372, %v930, 0
        %1052 = vmatpush.bf16.msra.mxu0 0
        %1053 = vmatpush.bf16.msra.mxu0 0
        %1054 = vmatpush.bf16.msra.mxu0 0
        %1055 = vmatpush.bf16.msra.mxu0 0
        %1056 = vmatpush.bf16.msra.mxu0 0
        %1057 = vmatpush.bf16.msra.mxu0 0
        %1058 = vmatpush.bf16.msra.mxu0 %v1030
        %1059 = vmatpush.bf16.msra.mxu0 %v1029
        %1060 = vmatmul.bf16.gmra.mxu0 %v1050
        %v1061 = vpop.f32.mrf.mxu0
        %v1062 = vadd.f32 0.0, %v1061
        %v1063 = vpop.f32.mrf.mxu0
        %1064 = vdwg.mxu0
        %v1065 = vpack.c.bf16 %v1046, %v1046
        %v1066 = vpack.c.bf16 %v1062, %v1062
        %v1067 = vld [vmem:[%s3] sm:$0xf]
        %v1068 = vld [vmem:[%s3 + $0x4] sm:$0xf]
        %v1069 = vld [vmem:[%s3 + $0x8] sm:$0xf]
        %v1070 = vld [vmem:[%s3 + $0xc] sm:$0xf]
        %v1075 = vunpack.c.l.b16 %v1067
        %v1076 = vunpack.c.l.b16 %v1068
        %v1077 = vunpack.c.l.b16 %v1069
        %v1078 = vunpack.c.l.b16 %v1070
        %v1079 = vpack.c.b16 %v1076, %v1075
        %v1080 = vpack.c.b16 %v1078, %v1077
        %1083 = vmatpush.bf16.msra.mxu0 0
        %1084 = vmatpush.bf16.msra.mxu0 0
        %1085 = vmatpush.bf16.msra.mxu0 0
        %1086 = vmatpush.bf16.msra.mxu0 0
        %1087 = vmatpush.bf16.msra.mxu0 0
        %1088 = vmatpush.bf16.msra.mxu0 0
        %1089 = vmatpush.bf16.msra.mxu0 %v1080
        %1090 = vmatpush.bf16.msra.mxu0 %v1079
        %1091 = vmatmul.bf16.gmra.mxu0 %v1034
        %v1092 = vpop.f32.mrf.mxu0
        %v1093 = vadd.f32 0.0, %v1092
        %v1094 = vpop.f32.mrf.mxu0
        %1095 = vdwg.mxu0
        %1096 = vmatpush.bf16.msra.mxu0 0
        %1097 = vmatpush.bf16.msra.mxu0 0
        %1098 = vmatpush.bf16.msra.mxu0 0
        %1099 = vmatpush.bf16.msra.mxu0 0
        %1100 = vmatpush.bf16.msra.mxu0 0
        %1101 = vmatpush.bf16.msra.mxu0 0
        %1102 = vmatpush.bf16.msra.mxu0 %v1080
        %1103 = vmatpush.bf16.msra.mxu0 %v1079
        %1104 = vmatmul.bf16.gmra.mxu0 %v1050
        %v1105 = vpop.f32.mrf.mxu0
        %v1106 = vadd.f32 0.0, %v1105
        %v1107 = vpop.f32.mrf.mxu0
        %1108 = vdwg.mxu0
        %v1109 = vpack.c.bf16 %v1093, %v1093
        %v1110 = vpack.c.bf16 %v1106, %v1106
        %1117 = vrot.lane.b32.xlu0 %v1011, 120
        %v1118 = vpop.permute.xlu0 %1117
        %1119 = vrot.lane.b32.xlu0 %v1012, 120
        %v1120 = vpop.permute.xlu0 %1119
        %1121 = vrot.lane.b32.xlu0 %v1013, 120
        %v1122 = vpop.permute.xlu0 %1121
        %1123 = vrot.lane.b32.xlu0 %v1014, 120
        %v1124 = vpop.permute.xlu0 %1123
        %1125 = vrot.lane.b32.xlu0 %v1015, 120
        %v1126 = vpop.permute.xlu0 %1125
        %1127 = vrot.lane.b32.xlu0 %v1016, 120
        %v1128 = vpop.permute.xlu0 %1127
        %1129 = vrot.lane.b32.xlu0 %v1011, 112
        %v1130 = vpop.permute.xlu0 %1129
        %1131 = vrot.lane.b32.xlu0 %v1012, 112
        %v1132 = vpop.permute.xlu0 %1131
        %1133 = vrot.lane.b32.xlu0 %v1013, 112
        %v1134 = vpop.permute.xlu0 %1133
        %1135 = vrot.lane.b32.xlu0 %v1014, 112
        %v1136 = vpop.permute.xlu0 %1135
        %1137 = vrot.lane.b32.xlu0 %v1015, 112
        %v1138 = vpop.permute.xlu0 %1137
        %1139 = vrot.lane.b32.xlu0 %v1016, 112
        %v1140 = vpop.permute.xlu0 %1139
        %1141 = vrot.lane.b32.xlu0 %v1011, 104
        %v1142 = vpop.permute.xlu0 %1141
        %1143 = vrot.lane.b32.xlu0 %v1012, 104
        %v1144 = vpop.permute.xlu0 %1143
        %1145 = vrot.lane.b32.xlu0 %v1013, 104
        %v1146 = vpop.permute.xlu0 %1145
        %1147 = vrot.lane.b32.xlu0 %v1014, 104
        %v1148 = vpop.permute.xlu0 %1147
        %1149 = vrot.lane.b32.xlu0 %v1015, 104
        %v1150 = vpop.permute.xlu0 %1149
        %1151 = vrot.lane.b32.xlu0 %v1016, 104
        %v1152 = vpop.permute.xlu0 %1151
        %1155 = vrot.lane.b32.xlu0 %v1065, 120
        %v1156 = vpop.permute.xlu0 %1155
        %1157 = vrot.lane.b32.xlu0 %v1066, 120
        %v1158 = vpop.permute.xlu0 %1157
        %1159 = vrot.lane.b32.xlu0 %v1065, 112
        %v1160 = vpop.permute.xlu0 %1159
        %1161 = vrot.lane.b32.xlu0 %v1066, 112
        %v1162 = vpop.permute.xlu0 %1161
        %1163 = vrot.lane.b32.xlu0 %v1065, 104
        %v1164 = vpop.permute.xlu0 %1163
        %1165 = vrot.lane.b32.xlu0 %v1066, 104
        %v1166 = vpop.permute.xlu0 %1165
        %1169 = vrot.lane.b32.xlu0 %v1109, 120
        %v1170 = vpop.permute.xlu0 %1169
        %1171 = vrot.lane.b32.xlu0 %v1110, 120
        %v1172 = vpop.permute.xlu0 %1171
        %1173 = vrot.lane.b32.xlu0 %v1109, 112
        %v1174 = vpop.permute.xlu0 %1173
        %1175 = vrot.lane.b32.xlu0 %v1110, 112
        %v1176 = vpop.permute.xlu0 %1175
        %1177 = vrot.lane.b32.xlu0 %v1109, 104
        %v1178 = vpop.permute.xlu0 %1177
        %1179 = vrot.lane.b32.xlu0 %v1110, 104
        %v1180 = vpop.permute.xlu0 %1179
        %v1181 = vunpack.c.l.b16 %v1011
        %v1182 = vunpack.c.l.b16 %v1012
        %v1183 = vunpack.c.l.b16 %v1013
        %v1184 = vpack.c.b16 %v1182, %v1181
        %v1185 = vpack.c.b16 %v1183, %v1183
        %vm1186 = vcmask 64512
        %v1188 = vsel %vm1186, %v1184, 0
        %v1191 = vsel %vm1186, %v1185, 0
        %v1194 = vsel %vm1186, %v1065, 0
        %1196 = vmatpush.bf16.xpose.msra.mxu0 0
        %1197 = vmatpush.bf16.xpose.msra.mxu0 0
        %1198 = vmatpush.bf16.xpose.msra.mxu0 0
        %1199 = vmatpush.bf16.xpose.msra.mxu0 0
        %1200 = vmatpush.bf16.xpose.msra.mxu0 0
        %1201 = vmatpush.bf16.xpose.msra.mxu0 0
        %1202 = vmatpush.bf16.xpose.msra.mxu0 0
        %1203 = vmatpush.bf16.xpose.msra.mxu0 %v1194
        %1204 = vmatmul.bf16.gmra.mxu0 %v1188
        %v1205 = vpop.f32.mrf.mxu0
        %v1206 = vadd.f32 0.0, %v1205
        %v1207 = vpop.f32.mrf.mxu0
        %v1208 = vadd.f32 0.0, %v1207
        %1209 = vmatmul.bf16.gmra.mxu0 %v1191
        %v1210 = vpop.f32.mrf.mxu0
        %v1211 = vadd.f32 0.0, %v1210
        %v1212 = vpop.f32.mrf.mxu0
        %1213 = vdwg.mxu0
        %v1214 = vunpack.c.l.b16 %v1014
        %v1215 = vunpack.c.l.b16 %v1015
        %v1216 = vunpack.c.l.b16 %v1016
        %v1217 = vpack.c.b16 %v1215, %v1214
        %v1218 = vpack.c.b16 %v1216, %v1216
        %v1220 = vsel %vm1186, %v1217, 0
        %v1223 = vsel %vm1186, %v1218, 0
        %v1226 = vsel %vm1186, %v1066, 0
        %1228 = vmatpush.bf16.xpose.msra.mxu0 0
        %1229 = vmatpush.bf16.xpose.msra.mxu0 0
        %1230 = vmatpush.bf16.xpose.msra.mxu0 0
        %1231 = vmatpush.bf16.xpose.msra.mxu0 0
        %1232 = vmatpush.bf16.xpose.msra.mxu0 0
        %1233 = vmatpush.bf16.xpose.msra.mxu0 0
        %1234 = vmatpush.bf16.xpose.msra.mxu0 0
        %1235 = vmatpush.bf16.xpose.msra.mxu0 %v1226
        %1236 = vmatmul.bf16.gmra.mxu0 %v1220
        %v1237 = vpop.f32.mrf.mxu0
        %v1238 = vadd.f32 0.0, %v1237
        %v1239 = vpop.f32.mrf.mxu0
        %v1240 = vadd.f32 0.0, %v1239
        %1241 = vmatmul.bf16.gmra.mxu0 %v1223
        %v1242 = vpop.f32.mrf.mxu0
        %v1243 = vadd.f32 0.0, %v1242
        %v1244 = vpop.f32.mrf.mxu0
        %1245 = vdwg.mxu0
        %v1246 = vunpack.c.l.b16 %v1118
        %v1247 = vunpack.c.l.b16 %v1120
        %v1248 = vunpack.c.l.b16 %v1122
        %v1249 = vpack.c.b16 %v1247, %v1246
        %v1250 = vpack.c.b16 %v1248, %v1248
        %v1252 = vsel %vm1186, %v1249, 0
        %v1255 = vsel %vm1186, %v1250, 0
        %v1258 = vsel %vm1186, %v1156, 0
        %1260 = vmatpush.bf16.xpose.msra.mxu0 0
        %1261 = vmatpush.bf16.xpose.msra.mxu0 0
        %1262 = vmatpush.bf16.xpose.msra.mxu0 0
        %1263 = vmatpush.bf16.xpose.msra.mxu0 0
        %1264 = vmatpush.bf16.xpose.msra.mxu0 0
        %1265 = vmatpush.bf16.xpose.msra.mxu0 0
        %1266 = vmatpush.bf16.xpose.msra.mxu0 0
        %1267 = vmatpush.bf16.xpose.msra.mxu0 %v1258
        %1268 = vmatmul.bf16.gmra.mxu0 %v1252
        %v1269 = vpop.f32.mrf.mxu0
        %v1270 = vadd.f32 0.0, %v1269
        %v1271 = vpop.f32.mrf.mxu0
        %v1272 = vadd.f32 0.0, %v1271
        %1273 = vmatmul.bf16.gmra.mxu0 %v1255
        %v1274 = vpop.f32.mrf.mxu0
        %v1275 = vadd.f32 0.0, %v1274
        %v1276 = vpop.f32.mrf.mxu0
        %1277 = vdwg.mxu0
        %v1278 = vunpack.c.l.b16 %v1124
        %v1279 = vunpack.c.l.b16 %v1126
        %v1280 = vunpack.c.l.b16 %v1128
        %v1281 = vpack.c.b16 %v1279, %v1278
        %v1282 = vpack.c.b16 %v1280, %v1280
        %v1284 = vsel %vm1186, %v1281, 0
        %v1287 = vsel %vm1186, %v1282, 0
        %v1290 = vsel %vm1186, %v1158, 0
        %1292 = vmatpush.bf16.xpose.msra.mxu0 0
        %1293 = vmatpush.bf16.xpose.msra.mxu0 0
        %1294 = vmatpush.bf16.xpose.msra.mxu0 0
        %1295 = vmatpush.bf16.xpose.msra.mxu0 0
        %1296 = vmatpush.bf16.xpose.msra.mxu0 0
        %1297 = vmatpush.bf16.xpose.msra.mxu0 0
        %1298 = vmatpush.bf16.xpose.msra.mxu0 0
        %1299 = vmatpush.bf16.xpose.msra.mxu0 %v1290
        %1300 = vmatmul.bf16.gmra.mxu0 %v1284
        %v1301 = vpop.f32.mrf.mxu0
        %v1302 = vadd.f32 0.0, %v1301
        %v1303 = vpop.f32.mrf.mxu0
        %v1304 = vadd.f32 0.0, %v1303
        %1305 = vmatmul.bf16.gmra.mxu0 %v1287
        %v1306 = vpop.f32.mrf.mxu0
        %v1307 = vadd.f32 0.0, %v1306
        %v1308 = vpop.f32.mrf.mxu0
        %1309 = vdwg.mxu0
        %v1310 = vunpack.c.l.b16 %v1130
        %v1311 = vunpack.c.l.b16 %v1132
        %v1312 = vunpack.c.l.b16 %v1134
        %v1313 = vpack.c.b16 %v1311, %v1310
        %v1314 = vpack.c.b16 %v1312, %v1312
        %v1316 = vsel %vm1186, %v1313, 0
        %v1319 = vsel %vm1186, %v1314, 0
        %v1322 = vsel %vm1186, %v1160, 0
        %1324 = vmatpush.bf16.xpose.msra.mxu0 0
        %1325 = vmatpush.bf16.xpose.msra.mxu0 0
        %1326 = vmatpush.bf16.xpose.msra.mxu0 0
        %1327 = vmatpush.bf16.xpose.msra.mxu0 0
        %1328 = vmatpush.bf16.xpose.msra.mxu0 0
        %1329 = vmatpush.bf16.xpose.msra.mxu0 0
        %1330 = vmatpush.bf16.xpose.msra.mxu0 0
        %1331 = vmatpush.bf16.xpose.msra.mxu0 %v1322
        %1332 = vmatmul.bf16.gmra.mxu0 %v1316
        %v1333 = vpop.f32.mrf.mxu0
        %v1334 = vadd.f32 0.0, %v1333
        %v1335 = vpop.f32.mrf.mxu0
        %v1336 = vadd.f32 0.0, %v1335
        %1337 = vmatmul.bf16.gmra.mxu0 %v1319
        %v1338 = vpop.f32.mrf.mxu0
        %v1339 = vadd.f32 0.0, %v1338
        %v1340 = vpop.f32.mrf.mxu0
        %1341 = vdwg.mxu0
        %v1342 = vunpack.c.l.b16 %v1136
        %v1343 = vunpack.c.l.b16 %v1138
        %v1344 = vunpack.c.l.b16 %v1140
        %v1345 = vpack.c.b16 %v1343, %v1342
        %v1346 = vpack.c.b16 %v1344, %v1344
        %v1348 = vsel %vm1186, %v1345, 0
        %v1351 = vsel %vm1186, %v1346, 0
        %v1354 = vsel %vm1186, %v1162, 0
        %1356 = vmatpush.bf16.xpose.msra.mxu0 0
        %1357 = vmatpush.bf16.xpose.msra.mxu0 0
        %1358 = vmatpush.bf16.xpose.msra.mxu0 0
        %1359 = vmatpush.bf16.xpose.msra.mxu0 0
        %1360 = vmatpush.bf16.xpose.msra.mxu0 0
        %1361 = vmatpush.bf16.xpose.msra.mxu0 0
        %1362 = vmatpush.bf16.xpose.msra.mxu0 0
        %1363 = vmatpush.bf16.xpose.msra.mxu0 %v1354
        %1364 = vmatmul.bf16.gmra.mxu0 %v1348
        %v1365 = vpop.f32.mrf.mxu0
        %v1366 = vadd.f32 0.0, %v1365
        %v1367 = vpop.f32.mrf.mxu0
        %v1368 = vadd.f32 0.0, %v1367
        %1369 = vmatmul.bf16.gmra.mxu0 %v1351
        %v1370 = vpop.f32.mrf.mxu0
        %v1371 = vadd.f32 0.0, %v1370
        %v1372 = vpop.f32.mrf.mxu0
        %1373 = vdwg.mxu0
        %v1374 = vunpack.c.l.b16 %v1142
        %v1375 = vunpack.c.l.b16 %v1144
        %v1376 = vunpack.c.l.b16 %v1146
        %v1377 = vpack.c.b16 %v1375, %v1374
        %v1378 = vpack.c.b16 %v1376, %v1376
        %v1380 = vsel %vm1186, %v1377, 0
        %v1383 = vsel %vm1186, %v1378, 0
        %v1386 = vsel %vm1186, %v1164, 0
        %1388 = vmatpush.bf16.xpose.msra.mxu0 0
        %1389 = vmatpush.bf16.xpose.msra.mxu0 0
        %1390 = vmatpush.bf16.xpose.msra.mxu0 0
        %1391 = vmatpush.bf16.xpose.msra.mxu0 0
        %1392 = vmatpush.bf16.xpose.msra.mxu0 0
        %1393 = vmatpush.bf16.xpose.msra.mxu0 0
        %1394 = vmatpush.bf16.xpose.msra.mxu0 0
        %1395 = vmatpush.bf16.xpose.msra.mxu0 %v1386
        %1396 = vmatmul.bf16.gmra.mxu0 %v1380
        %v1397 = vpop.f32.mrf.mxu0
        %v1398 = vadd.f32 0.0, %v1397
        %v1399 = vpop.f32.mrf.mxu0
        %v1400 = vadd.f32 0.0, %v1399
        %1401 = vmatmul.bf16.gmra.mxu0 %v1383
        %v1402 = vpop.f32.mrf.mxu0
        %v1403 = vadd.f32 0.0, %v1402
        %v1404 = vpop.f32.mrf.mxu0
        %1405 = vdwg.mxu0
        %v1406 = vunpack.c.l.b16 %v1148
        %v1407 = vunpack.c.l.b16 %v1150
        %v1408 = vunpack.c.l.b16 %v1152
        %v1409 = vpack.c.b16 %v1407, %v1406
        %v1410 = vpack.c.b16 %v1408, %v1408
        %v1412 = vsel %vm1186, %v1409, 0
        %v1415 = vsel %vm1186, %v1410, 0
        %v1418 = vsel %vm1186, %v1166, 0
        %1420 = vmatpush.bf16.xpose.msra.mxu0 0
        %1421 = vmatpush.bf16.xpose.msra.mxu0 0
        %1422 = vmatpush.bf16.xpose.msra.mxu0 0
        %1423 = vmatpush.bf16.xpose.msra.mxu0 0
        %1424 = vmatpush.bf16.xpose.msra.mxu0 0
        %1425 = vmatpush.bf16.xpose.msra.mxu0 0
        %1426 = vmatpush.bf16.xpose.msra.mxu0 0
        %1427 = vmatpush.bf16.xpose.msra.mxu0 %v1418
        %1428 = vmatmul.bf16.gmra.mxu0 %v1412
        %v1429 = vpop.f32.mrf.mxu0
        %v1430 = vadd.f32 0.0, %v1429
        %v1431 = vpop.f32.mrf.mxu0
        %v1432 = vadd.f32 0.0, %v1431
        %1433 = vmatmul.bf16.gmra.mxu0 %v1415
        %v1434 = vpop.f32.mrf.mxu0
        %v1435 = vadd.f32 0.0, %v1434
        %v1436 = vpop.f32.mrf.mxu0
        %1437 = vdwg.mxu0
        %vm1438 = vcmask 23552
        %v1439 = vsel %vm1438, %v1206, -inf
        %1440 = vmax.xlane.f32.xlu0 %v1439
        %v1441 = vpop.xlane.xlu0 %1440
        %v1442 = vsel %vm1438, %v1208, -inf
        %1443 = vmax.xlane.f32.xlu0 %v1442
        %v1444 = vpop.xlane.xlu0 %1443
        %vm1445 = vcmask 16384
        %v1446 = vsel %vm1445, %v1211, -inf
        %1447 = vmax.xlane.f32.xlu0 %v1446
        %v1448 = vpop.xlane.xlu0 %1447
        %v1449 = vsel %vm1438, %v1238, -inf
        %1450 = vmax.xlane.f32.xlu0 %v1449
        %v1451 = vpop.xlane.xlu0 %1450
        %v1452 = vsel %vm1438, %v1240, -inf
        %1453 = vmax.xlane.f32.xlu0 %v1452
        %v1454 = vpop.xlane.xlu0 %1453
        %v1455 = vsel %vm1445, %v1243, -inf
        %1456 = vmax.xlane.f32.xlu0 %v1455
        %v1457 = vpop.xlane.xlu0 %1456
        %v1458 = vsel %vm1438, %v1270, -inf
        %1459 = vmax.xlane.f32.xlu0 %v1458
        %v1460 = vpop.xlane.xlu0 %1459
        %v1461 = vsel %vm1438, %v1272, -inf
        %1462 = vmax.xlane.f32.xlu0 %v1461
        %v1463 = vpop.xlane.xlu0 %1462
        %v1464 = vsel %vm1445, %v1275, -inf
        %1465 = vmax.xlane.f32.xlu0 %v1464
        %v1466 = vpop.xlane.xlu0 %1465
        %v1467 = vsel %vm1438, %v1302, -inf
        %1468 = vmax.xlane.f32.xlu0 %v1467
        %v1469 = vpop.xlane.xlu0 %1468
        %v1470 = vsel %vm1438, %v1304, -inf
        %1471 = vmax.xlane.f32.xlu0 %v1470
        %v1472 = vpop.xlane.xlu0 %1471
        %v1473 = vsel %vm1445, %v1307, -inf
        %1474 = vmax.xlane.f32.xlu0 %v1473
        %v1475 = vpop.xlane.xlu0 %1474
        %v1476 = vsel %vm1438, %v1334, -inf
        %1477 = vmax.xlane.f32.xlu0 %v1476
        %v1478 = vpop.xlane.xlu0 %1477
        %v1479 = vsel %vm1438, %v1336, -inf
        %1480 = vmax.xlane.f32.xlu0 %v1479
        %v1481 = vpop.xlane.xlu0 %1480
        %v1482 = vsel %vm1445, %v1339, -inf
        %1483 = vmax.xlane.f32.xlu0 %v1482
        %v1484 = vpop.xlane.xlu0 %1483
        %v1485 = vsel %vm1438, %v1366, -inf
        %1486 = vmax.xlane.f32.xlu0 %v1485
        %v1487 = vpop.xlane.xlu0 %1486
        %v1488 = vsel %vm1438, %v1368, -inf
        %1489 = vmax.xlane.f32.xlu0 %v1488
        %v1490 = vpop.xlane.xlu0 %1489
        %v1491 = vsel %vm1445, %v1371, -inf
        %1492 = vmax.xlane.f32.xlu0 %v1491
        %v1493 = vpop.xlane.xlu0 %1492
        %v1494 = vsel %vm1438, %v1398, -inf
        %1495 = vmax.xlane.f32.xlu0 %v1494
        %v1496 = vpop.xlane.xlu0 %1495
        %v1497 = vsel %vm1438, %v1400, -inf
        %1498 = vmax.xlane.f32.xlu0 %v1497
        %v1499 = vpop.xlane.xlu0 %1498
        %v1500 = vsel %vm1445, %v1403, -inf
        %1501 = vmax.xlane.f32.xlu0 %v1500
        %v1502 = vpop.xlane.xlu0 %1501
        %v1503 = vsel %vm1438, %v1430, -inf
        %1504 = vmax.xlane.f32.xlu0 %v1503
        %v1505 = vpop.xlane.xlu0 %1504
        %v1506 = vsel %vm1438, %v1432, -inf
        %1507 = vmax.xlane.f32.xlu0 %v1506
        %v1508 = vpop.xlane.xlu0 %1507
        %v1509 = vsel %vm1445, %v1435, -inf
        %1510 = vmax.xlane.f32.xlu0 %v1509
        %v1511 = vpop.xlane.xlu0 %1510
        %v1512 = vsub.f32 %v1206, %v1441
        %v1513 = vsub.f32 %v1208, %v1444
        %v1514 = vsub.f32 %v1211, %v1448
        %v1515 = vsub.f32 %v1238, %v1451
        %v1516 = vsub.f32 %v1240, %v1454
        %v1517 = vsub.f32 %v1243, %v1457
        %v1518 = vsub.f32 %v1270, %v1460
        %v1519 = vsub.f32 %v1272, %v1463
        %v1520 = vsub.f32 %v1275, %v1466
        %v1521 = vsub.f32 %v1302, %v1469
        %v1522 = vsub.f32 %v1304, %v1472
        %v1523 = vsub.f32 %v1307, %v1475
        %v1524 = vsub.f32 %v1334, %v1478
        %v1525 = vsub.f32 %v1336, %v1481
        %v1526 = vsub.f32 %v1339, %v1484
        %v1527 = vsub.f32 %v1366, %v1487
        %v1528 = vsub.f32 %v1368, %v1490
        %v1529 = vsub.f32 %v1371, %v1493
        %v1530 = vsub.f32 %v1398, %v1496
        %v1531 = vsub.f32 %v1400, %v1499
        %v1532 = vsub.f32 %v1403, %v1502
        %v1533 = vsub.f32 %v1430, %v1505
        %v1534 = vsub.f32 %v1432, %v1508
        %v1535 = vsub.f32 %v1435, %v1511
        %v1536 = vmul.f32 %v1512, 1.442695
        %v1537 = vpow.pop %v1536
        %v1538 = vmul.f32 %v1513, 1.442695
        %v1539 = vpow.pop %v1538
        %v1540 = vmul.f32 %v1514, 1.442695
        %v1541 = vpow.pop %v1540
        %v1542 = vmul.f32 %v1515, 1.442695
        %v1543 = vpow.pop %v1542
        %v1544 = vmul.f32 %v1516, 1.442695
        %v1545 = vpow.pop %v1544
        %v1546 = vmul.f32 %v1517, 1.442695
        %v1547 = vpow.pop %v1546
        %v1548 = vmul.f32 %v1518, 1.442695
        %v1549 = vpow.pop %v1548
        %v1550 = vmul.f32 %v1519, 1.442695
        %v1551 = vpow.pop %v1550
        %v1552 = vmul.f32 %v1520, 1.442695
        %v1553 = vpow.pop %v1552
        %v1554 = vmul.f32 %v1521, 1.442695
        %v1555 = vpow.pop %v1554
        %v1556 = vmul.f32 %v1522, 1.442695
        %v1557 = vpow.pop %v1556
        %v1558 = vmul.f32 %v1523, 1.442695
        %v1559 = vpow.pop %v1558
        %v1560 = vmul.f32 %v1524, 1.442695
        %v1561 = vpow.pop %v1560
        %v1562 = vmul.f32 %v1525, 1.442695
        %v1563 = vpow.pop %v1562
        %v1564 = vmul.f32 %v1526, 1.442695
        %v1565 = vpow.pop %v1564
        %v1566 = vmul.f32 %v1527, 1.442695
        %v1567 = vpow.pop %v1566
        %v1568 = vmul.f32 %v1528, 1.442695
        %v1569 = vpow.pop %v1568
        %v1570 = vmul.f32 %v1529, 1.442695
        %v1571 = vpow.pop %v1570
        %v1572 = vmul.f32 %v1530, 1.442695
        %v1573 = vpow.pop %v1572
        %v1574 = vmul.f32 %v1531, 1.442695
        %v1575 = vpow.pop %v1574
        %v1576 = vmul.f32 %v1532, 1.442695
        %v1577 = vpow.pop %v1576
        %v1578 = vmul.f32 %v1533, 1.442695
        %v1579 = vpow.pop %v1578
        %v1580 = vmul.f32 %v1534, 1.442695
        %v1581 = vpow.pop %v1580
        %v1582 = vmul.f32 %v1535, 1.442695
        %v1583 = vpow.pop %v1582
        %v1584 = vsel %vm1438, %v1537, 0.0
        %1585 = vadd.xlane.f32.xlu0 %v1584
        %v1586 = vpop.xlane.xlu0 %1585
        %v1587 = vsel %vm1438, %v1539, 0.0
        %1588 = vadd.xlane.f32.xlu0 %v1587
        %v1589 = vpop.xlane.xlu0 %1588
        %v1590 = vsel %vm1445, %v1541, 0.0
        %1591 = vadd.xlane.f32.xlu0 %v1590
        %v1592 = vpop.xlane.xlu0 %1591
        %v1593 = vsel %vm1438, %v1543, 0.0
        %1594 = vadd.xlane.f32.xlu0 %v1593
        %v1595 = vpop.xlane.xlu0 %1594
        %v1596 = vsel %vm1438, %v1545, 0.0
        %1597 = vadd.xlane.f32.xlu0 %v1596
        %v1598 = vpop.xlane.xlu0 %1597
        %v1599 = vsel %vm1445, %v1547, 0.0
        %1600 = vadd.xlane.f32.xlu0 %v1599
        %v1601 = vpop.xlane.xlu0 %1600
        %v1602 = vsel %vm1438, %v1549, 0.0
        %1603 = vadd.xlane.f32.xlu0 %v1602
        %v1604 = vpop.xlane.xlu0 %1603
        %v1605 = vsel %vm1438, %v1551, 0.0
        %1606 = vadd.xlane.f32.xlu0 %v1605
        %v1607 = vpop.xlane.xlu0 %1606
        %v1608 = vsel %vm1445, %v1553, 0.0
        %1609 = vadd.xlane.f32.xlu0 %v1608
        %v1610 = vpop.xlane.xlu0 %1609
        %v1611 = vsel %vm1438, %v1555, 0.0
        %1612 = vadd.xlane.f32.xlu0 %v1611
        %v1613 = vpop.xlane.xlu0 %1612
        %v1614 = vsel %vm1438, %v1557, 0.0
        %1615 = vadd.xlane.f32.xlu0 %v1614
        %v1616 = vpop.xlane.xlu0 %1615
        %v1617 = vsel %vm1445, %v1559, 0.0
        %1618 = vadd.xlane.f32.xlu0 %v1617
        %v1619 = vpop.xlane.xlu0 %1618
        %v1620 = vsel %vm1438, %v1561, 0.0
        %1621 = vadd.xlane.f32.xlu0 %v1620
        %v1622 = vpop.xlane.xlu0 %1621
        %v1623 = vsel %vm1438, %v1563, 0.0
        %1624 = vadd.xlane.f32.xlu0 %v1623
        %v1625 = vpop.xlane.xlu0 %1624
        %v1626 = vsel %vm1445, %v1565, 0.0
        %1627 = vadd.xlane.f32.xlu0 %v1626
        %v1628 = vpop.xlane.xlu0 %1627
        %v1629 = vsel %vm1438, %v1567, 0.0
        %1630 = vadd.xlane.f32.xlu0 %v1629
        %v1631 = vpop.xlane.xlu0 %1630
        %v1632 = vsel %vm1438, %v1569, 0.0
        %1633 = vadd.xlane.f32.xlu0 %v1632
        %v1634 = vpop.xlane.xlu0 %1633
        %v1635 = vsel %vm1445, %v1571, 0.0
        %1636 = vadd.xlane.f32.xlu0 %v1635
        %v1637 = vpop.xlane.xlu0 %1636
        %v1638 = vsel %vm1438, %v1573, 0.0
        %1639 = vadd.xlane.f32.xlu0 %v1638
        %v1640 = vpop.xlane.xlu0 %1639
        %v1641 = vsel %vm1438, %v1575, 0.0
        %1642 = vadd.xlane.f32.xlu0 %v1641
        %v1643 = vpop.xlane.xlu0 %1642
        %v1644 = vsel %vm1445, %v1577, 0.0
        %1645 = vadd.xlane.f32.xlu0 %v1644
        %v1646 = vpop.xlane.xlu0 %1645
        %v1647 = vsel %vm1438, %v1579, 0.0
        %1648 = vadd.xlane.f32.xlu0 %v1647
        %v1649 = vpop.xlane.xlu0 %1648
        %v1650 = vsel %vm1438, %v1581, 0.0
        %1651 = vadd.xlane.f32.xlu0 %v1650
        %v1652 = vpop.xlane.xlu0 %1651
        %v1653 = vsel %vm1445, %v1583, 0.0
        %1654 = vadd.xlane.f32.xlu0 %v1653
        %v1655 = vpop.xlane.xlu0 %1654
        %v1656 = vrcp.pop %v1586
        %v1657 = vrcp.pop %v1589
        %v1658 = vrcp.pop %v1592
        %v1659 = vrcp.pop %v1595
        %v1660 = vrcp.pop %v1598
        %v1661 = vrcp.pop %v1601
        %v1662 = vrcp.pop %v1604
        %v1663 = vrcp.pop %v1607
        %v1664 = vrcp.pop %v1610
        %v1665 = vrcp.pop %v1613
        %v1666 = vrcp.pop %v1616
        %v1667 = vrcp.pop %v1619
        %v1668 = vrcp.pop %v1622
        %v1669 = vrcp.pop %v1625
        %v1670 = vrcp.pop %v1628
        %v1671 = vrcp.pop %v1631
        %v1672 = vrcp.pop %v1634
        %v1673 = vrcp.pop %v1637
        %v1674 = vrcp.pop %v1640
        %v1675 = vrcp.pop %v1643
        %v1676 = vrcp.pop %v1646
        %v1677 = vrcp.pop %v1649
        %v1678 = vrcp.pop %v1652
        %v1679 = vrcp.pop %v1655
        %v1680 = vmul.f32 %v1537, %v1656
        %v1681 = vmul.f32 %v1539, %v1657
        %v1682 = vmul.f32 %v1541, %v1658
        %v1683 = vmul.f32 %v1543, %v1659
        %v1684 = vmul.f32 %v1545, %v1660
        %v1685 = vmul.f32 %v1547, %v1661
        %v1686 = vmul.f32 %v1549, %v1662
        %v1687 = vmul.f32 %v1551, %v1663
        %v1688 = vmul.f32 %v1553, %v1664
        %v1689 = vmul.f32 %v1555, %v1665
        %v1690 = vmul.f32 %v1557, %v1666
        %v1691 = vmul.f32 %v1559, %v1667
        %v1692 = vmul.f32 %v1561, %v1668
        %v1693 = vmul.f32 %v1563, %v1669
        %v1694 = vmul.f32 %v1565, %v1670
        %v1695 = vmul.f32 %v1567, %v1671
        %v1696 = vmul.f32 %v1569, %v1672
        %v1697 = vmul.f32 %v1571, %v1673
        %v1698 = vmul.f32 %v1573, %v1674
        %v1699 = vmul.f32 %v1575, %v1675
        %v1700 = vmul.f32 %v1577, %v1676
        %v1701 = vmul.f32 %v1579, %v1677
        %v1702 = vmul.f32 %v1581, %v1678
        %v1703 = vmul.f32 %v1583, %v1679
        %v1704 = vpack.c.bf16 %v1680, %v1680
        %v1705 = vpack.c.bf16 %v1681, %v1681
        %v1706 = vpack.c.bf16 %v1682, %v1682
        %v1707 = vpack.c.bf16 %v1683, %v1683
        %v1708 = vpack.c.bf16 %v1684, %v1684
        %v1709 = vpack.c.bf16 %v1685, %v1685
        %v1710 = vpack.c.bf16 %v1686, %v1686
        %v1711 = vpack.c.bf16 %v1687, %v1687
        %v1712 = vpack.c.bf16 %v1688, %v1688
        %v1713 = vpack.c.bf16 %v1689, %v1689
        %v1714 = vpack.c.bf16 %v1690, %v1690
        %v1715 = vpack.c.bf16 %v1691, %v1691
        %v1716 = vpack.c.bf16 %v1692, %v1692
        %v1717 = vpack.c.bf16 %v1693, %v1693
        %v1718 = vpack.c.bf16 %v1694, %v1694
        %v1719 = vpack.c.bf16 %v1695, %v1695
        %v1720 = vpack.c.bf16 %v1696, %v1696
        %v1721 = vpack.c.bf16 %v1697, %v1697
        %v1722 = vpack.c.bf16 %v1698, %v1698
        %v1723 = vpack.c.bf16 %v1699, %v1699
        %v1724 = vpack.c.bf16 %v1700, %v1700
        %v1725 = vpack.c.bf16 %v1701, %v1701
        %v1726 = vpack.c.bf16 %v1702, %v1702
        %v1727 = vpack.c.bf16 %v1703, %v1703
        %v1731 = vunpack.c.l.b16 %v1704
        %v1732 = vunpack.c.l.b16 %v1705
        %v1733 = vunpack.c.l.b16 %v1706
        %v1734 = vpack.c.b16 %v1732, %v1731
        %v1735 = vpack.c.b16 %v1733, %v1733
        %v1737 = vsel %vm1438, %v1734, 0
        %v1740 = vsel %vm1438, %v1735, 0
        %v1742 = vsel %vm742, 4294967295, 65535
        %v1743 = vsel %vm856, %v1742, 0
        %v1745 = vand.u32 %v1109, %v1743
        %1747 = vmatpush.bf16.msra.mxu0 0
        %1748 = vmatpush.bf16.msra.mxu0 0
        %1749 = vmatpush.bf16.msra.mxu0 0
        %1750 = vmatpush.bf16.msra.mxu0 0
        %1751 = vmatpush.bf16.msra.mxu0 0
        %1752 = vmatpush.bf16.msra.mxu0 0
        %1753 = vmatpush.bf16.msra.mxu0 0
        %1754 = vmatpush.bf16.msra.mxu0 %v1745
        %1755 = vmatmul.bf16.gmra.mxu0 %v1737
        %v1756 = vpop.f32.mrf.mxu0
        %v1757 = vadd.f32 0.0, %v1756
        %v1758 = vpop.f32.mrf.mxu0
        %v1759 = vadd.f32 0.0, %v1758
        %1760 = vmatmul.bf16.gmra.mxu0 %v1740
        %v1761 = vpop.f32.mrf.mxu0
        %v1762 = vadd.f32 0.0, %v1761
        %v1763 = vpop.f32.mrf.mxu0
        %1764 = vdwg.mxu0
        %v1768 = vunpack.c.l.b16 %v1707
        %v1769 = vunpack.c.l.b16 %v1708
        %v1770 = vunpack.c.l.b16 %v1709
        %v1771 = vpack.c.b16 %v1769, %v1768
        %v1772 = vpack.c.b16 %v1770, %v1770
        %v1774 = vsel %vm1438, %v1771, 0
        %v1777 = vsel %vm1438, %v1772, 0
        %v1780 = vand.u32 %v1110, %v1743
        %1782 = vmatpush.bf16.msra.mxu0 0
        %1783 = vmatpush.bf16.msra.mxu0 0
        %1784 = vmatpush.bf16.msra.mxu0 0
        %1785 = vmatpush.bf16.msra.mxu0 0
        %1786 = vmatpush.bf16.msra.mxu0 0
        %1787 = vmatpush.bf16.msra.mxu0 0
        %1788 = vmatpush.bf16.msra.mxu0 0
        %1789 = vmatpush.bf16.msra.mxu0 %v1780
        %1790 = vmatmul.bf16.gmra.mxu0 %v1774
        %v1791 = vpop.f32.mrf.mxu0
        %v1792 = vadd.f32 0.0, %v1791
        %v1793 = vpop.f32.mrf.mxu0
        %v1794 = vadd.f32 0.0, %v1793
        %1795 = vmatmul.bf16.gmra.mxu0 %v1777
        %v1796 = vpop.f32.mrf.mxu0
        %v1797 = vadd.f32 0.0, %v1796
        %v1798 = vpop.f32.mrf.mxu0
        %1799 = vdwg.mxu0
        %v1803 = vunpack.c.l.b16 %v1710
        %v1804 = vunpack.c.l.b16 %v1711
        %v1805 = vunpack.c.l.b16 %v1712
        %v1806 = vpack.c.b16 %v1804, %v1803
        %v1807 = vpack.c.b16 %v1805, %v1805
        %v1809 = vsel %vm1438, %v1806, 0
        %v1812 = vsel %vm1438, %v1807, 0
        %v1815 = vand.u32 %v1170, %v1743
        %1817 = vmatpush.bf16.msra.mxu0 0
        %1818 = vmatpush.bf16.msra.mxu0 0
        %1819 = vmatpush.bf16.msra.mxu0 0
        %1820 = vmatpush.bf16.msra.mxu0 0
        %1821 = vmatpush.bf16.msra.mxu0 0
        %1822 = vmatpush.bf16.msra.mxu0 0
        %1823 = vmatpush.bf16.msra.mxu0 0
        %1824 = vmatpush.bf16.msra.mxu0 %v1815
        %1825 = vmatmul.bf16.gmra.mxu0 %v1809
        %v1826 = vpop.f32.mrf.mxu0
        %v1827 = vadd.f32 0.0, %v1826
        %v1828 = vpop.f32.mrf.mxu0
        %v1829 = vadd.f32 0.0, %v1828
        %1830 = vmatmul.bf16.gmra.mxu0 %v1812
        %v1831 = vpop.f32.mrf.mxu0
        %v1832 = vadd.f32 0.0, %v1831
        %v1833 = vpop.f32.mrf.mxu0
        %1834 = vdwg.mxu0
        %v1838 = vunpack.c.l.b16 %v1713
        %v1839 = vunpack.c.l.b16 %v1714
        %v1840 = vunpack.c.l.b16 %v1715
        %v1841 = vpack.c.b16 %v1839, %v1838
        %v1842 = vpack.c.b16 %v1840, %v1840
        %v1844 = vsel %vm1438, %v1841, 0
        %v1847 = vsel %vm1438, %v1842, 0
        %v1850 = vand.u32 %v1172, %v1743
        %1852 = vmatpush.bf16.msra.mxu0 0
        %1853 = vmatpush.bf16.msra.mxu0 0
        %1854 = vmatpush.bf16.msra.mxu0 0
        %1855 = vmatpush.bf16.msra.mxu0 0
        %1856 = vmatpush.bf16.msra.mxu0 0
        %1857 = vmatpush.bf16.msra.mxu0 0
        %1858 = vmatpush.bf16.msra.mxu0 0
        %1859 = vmatpush.bf16.msra.mxu0 %v1850
        %1860 = vmatmul.bf16.gmra.mxu0 %v1844
        %v1861 = vpop.f32.mrf.mxu0
        %v1862 = vadd.f32 0.0, %v1861
        %v1863 = vpop.f32.mrf.mxu0
        %v1864 = vadd.f32 0.0, %v1863
        %1865 = vmatmul.bf16.gmra.mxu0 %v1847
        %v1866 = vpop.f32.mrf.mxu0
        %v1867 = vadd.f32 0.0, %v1866
        %v1868 = vpop.f32.mrf.mxu0
        %1869 = vdwg.mxu0
        %v1873 = vunpack.c.l.b16 %v1716
        %v1874 = vunpack.c.l.b16 %v1717
        %v1875 = vunpack.c.l.b16 %v1718
        %v1876 = vpack.c.b16 %v1874, %v1873
        %v1877 = vpack.c.b16 %v1875, %v1875
        %v1879 = vsel %vm1438, %v1876, 0
        %v1882 = vsel %vm1438, %v1877, 0
        %v1885 = vand.u32 %v1174, %v1743
        %1887 = vmatpush.bf16.msra.mxu0 0
        %1888 = vmatpush.bf16.msra.mxu0 0
        %1889 = vmatpush.bf16.msra.mxu0 0
        %1890 = vmatpush.bf16.msra.mxu0 0
        %1891 = vmatpush.bf16.msra.mxu0 0
        %1892 = vmatpush.bf16.msra.mxu0 0
        %1893 = vmatpush.bf16.msra.mxu0 0
        %1894 = vmatpush.bf16.msra.mxu0 %v1885
        %1895 = vmatmul.bf16.gmra.mxu0 %v1879
        %v1896 = vpop.f32.mrf.mxu0
        %v1897 = vadd.f32 0.0, %v1896
        %v1898 = vpop.f32.mrf.mxu0
        %v1899 = vadd.f32 0.0, %v1898
        %1900 = vmatmul.bf16.gmra.mxu0 %v1882
        %v1901 = vpop.f32.mrf.mxu0
        %v1902 = vadd.f32 0.0, %v1901
        %v1903 = vpop.f32.mrf.mxu0
        %1904 = vdwg.mxu0
        %v1908 = vunpack.c.l.b16 %v1719
        %v1909 = vunpack.c.l.b16 %v1720
        %v1910 = vunpack.c.l.b16 %v1721
        %v1911 = vpack.c.b16 %v1909, %v1908
        %v1912 = vpack.c.b16 %v1910, %v1910
        %v1914 = vsel %vm1438, %v1911, 0
        %v1917 = vsel %vm1438, %v1912, 0
        %v1920 = vand.u32 %v1176, %v1743
        %1922 = vmatpush.bf16.msra.mxu0 0
        %1923 = vmatpush.bf16.msra.mxu0 0
        %1924 = vmatpush.bf16.msra.mxu0 0
        %1925 = vmatpush.bf16.msra.mxu0 0
        %1926 = vmatpush.bf16.msra.mxu0 0
        %1927 = vmatpush.bf16.msra.mxu0 0
        %1928 = vmatpush.bf16.msra.mxu0 0
        %1929 = vmatpush.bf16.msra.mxu0 %v1920
        %1930 = vmatmul.bf16.gmra.mxu0 %v1914
        %v1931 = vpop.f32.mrf.mxu0
        %v1932 = vadd.f32 0.0, %v1931
        %v1933 = vpop.f32.mrf.mxu0
        %v1934 = vadd.f32 0.0, %v1933
        %1935 = vmatmul.bf16.gmra.mxu0 %v1917
        %v1936 = vpop.f32.mrf.mxu0
        %v1937 = vadd.f32 0.0, %v1936
        %v1938 = vpop.f32.mrf.mxu0
        %1939 = vdwg.mxu0
        %v1943 = vunpack.c.l.b16 %v1722
        %v1944 = vunpack.c.l.b16 %v1723
        %v1945 = vunpack.c.l.b16 %v1724
        %v1946 = vpack.c.b16 %v1944, %v1943
        %v1947 = vpack.c.b16 %v1945, %v1945
        %v1949 = vsel %vm1438, %v1946, 0
        %v1952 = vsel %vm1438, %v1947, 0
        %v1955 = vand.u32 %v1178, %v1743
        %1957 = vmatpush.bf16.msra.mxu0 0
        %1958 = vmatpush.bf16.msra.mxu0 0
        %1959 = vmatpush.bf16.msra.mxu0 0
        %1960 = vmatpush.bf16.msra.mxu0 0
        %1961 = vmatpush.bf16.msra.mxu0 0
        %1962 = vmatpush.bf16.msra.mxu0 0
        %1963 = vmatpush.bf16.msra.mxu0 0
        %1964 = vmatpush.bf16.msra.mxu0 %v1955
        %1965 = vmatmul.bf16.gmra.mxu0 %v1949
        %v1966 = vpop.f32.mrf.mxu0
        %v1967 = vadd.f32 0.0, %v1966
        %v1968 = vpop.f32.mrf.mxu0
        %v1969 = vadd.f32 0.0, %v1968
        %1970 = vmatmul.bf16.gmra.mxu0 %v1952
        %v1971 = vpop.f32.mrf.mxu0
        %v1972 = vadd.f32 0.0, %v1971
        %v1973 = vpop.f32.mrf.mxu0
        %1974 = vdwg.mxu0
        %v1978 = vunpack.c.l.b16 %v1725
        %v1979 = vunpack.c.l.b16 %v1726
        %v1980 = vunpack.c.l.b16 %v1727
        %v1981 = vpack.c.b16 %v1979, %v1978
        %v1982 = vpack.c.b16 %v1980, %v1980
        %v1984 = vsel %vm1438, %v1981, 0
        %v1987 = vsel %vm1438, %v1982, 0
        %v1990 = vand.u32 %v1180, %v1743
        %1992 = vmatpush.bf16.msra.mxu0 0
        %1993 = vmatpush.bf16.msra.mxu0 0
        %1994 = vmatpush.bf16.msra.mxu0 0
        %1995 = vmatpush.bf16.msra.mxu0 0
        %1996 = vmatpush.bf16.msra.mxu0 0
        %1997 = vmatpush.bf16.msra.mxu0 0
        %1998 = vmatpush.bf16.msra.mxu0 0
        %1999 = vmatpush.bf16.msra.mxu0 %v1990
        %2000 = vmatmul.bf16.gmra.mxu0 %v1984
        %v2001 = vpop.f32.mrf.mxu0
        %v2002 = vadd.f32 0.0, %v2001
        %v2003 = vpop.f32.mrf.mxu0
        %v2004 = vadd.f32 0.0, %v2003
        %2005 = vmatmul.bf16.gmra.mxu0 %v1987
        %v2006 = vpop.f32.mrf.mxu0
        %v2007 = vadd.f32 0.0, %v2006
        %v2008 = vpop.f32.mrf.mxu0
        %2009 = vdwg.mxu0
        %v2010 = vpack.c.bf16 %v1757, %v1757
        %v2011 = vpack.c.bf16 %v1759, %v1759
        %v2012 = vpack.c.bf16 %v1762, %v1762
        %v2013 = vpack.c.bf16 %v1792, %v1792
        %v2014 = vpack.c.bf16 %v1794, %v1794
        %v2015 = vpack.c.bf16 %v1797, %v1797
        %v2016 = vpack.c.bf16 %v1827, %v1827
        %v2017 = vpack.c.bf16 %v1829, %v1829
        %v2018 = vpack.c.bf16 %v1832, %v1832
        %v2019 = vpack.c.bf16 %v1862, %v1862
        %v2020 = vpack.c.bf16 %v1864, %v1864
        %v2021 = vpack.c.bf16 %v1867, %v1867
        %v2022 = vpack.c.bf16 %v1897, %v1897
        %v2023 = vpack.c.bf16 %v1899, %v1899
        %v2024 = vpack.c.bf16 %v1902, %v1902
        %v2025 = vpack.c.bf16 %v1932, %v1932
        %v2026 = vpack.c.bf16 %v1934, %v1934
        %v2027 = vpack.c.bf16 %v1937, %v1937
        %v2028 = vpack.c.bf16 %v1967, %v1967
        %v2029 = vpack.c.bf16 %v1969, %v1969
        %v2030 = vpack.c.bf16 %v1972, %v1972
        %v2031 = vpack.c.bf16 %v2002, %v2002
        %v2032 = vpack.c.bf16 %v2004, %v2004
        %v2033 = vpack.c.bf16 %v2007, %v2007
        %v2040 = vunpack.c.l.b16 %v2010
        %v2041 = vunpack.c.l.b16 %v2011
        %v2042 = vunpack.c.l.b16 %v2012
        %v2043 = vunpack.c.l.b16 %v2013
        %v2044 = vunpack.c.l.b16 %v2014
        %v2045 = vunpack.c.l.b16 %v2015
        %v2046 = vpack.c.b16 %v2041, %v2040
        %v2047 = vpack.c.b16 %v2042, %v2042
        %v2048 = vpack.c.b16 %v2044, %v2043
        %v2049 = vpack.c.b16 %v2045, %v2045
        %v2056 = vunpack.c.l.b16 %v2016
        %v2057 = vunpack.c.l.b16 %v2017
        %v2058 = vunpack.c.l.b16 %v2018
        %v2059 = vunpack.c.l.b16 %v2019
        %v2060 = vunpack.c.l.b16 %v2020
        %v2061 = vunpack.c.l.b16 %v2021
        %v2062 = vpack.c.b16 %v2057, %v2056
        %v2063 = vpack.c.b16 %v2058, %v2058
        %v2064 = vpack.c.b16 %v2060, %v2059
        %v2065 = vpack.c.b16 %v2061, %v2061
        %2066 = vrot.lane.b32.xlu0 %v2062, 8
        %v2067 = vpop.permute.xlu0 %2066
        %2068 = vrot.lane.b32.xlu0 %v2063, 8
        %v2069 = vpop.permute.xlu0 %2068
        %2070 = vrot.lane.b32.xlu0 %v2064, 8
        %v2071 = vpop.permute.xlu0 %2070
        %2072 = vrot.lane.b32.xlu0 %v2065, 8
        %v2073 = vpop.permute.xlu0 %2072
        %v2080 = vunpack.c.l.b16 %v2022
        %v2081 = vunpack.c.l.b16 %v2023
        %v2082 = vunpack.c.l.b16 %v2024
        %v2083 = vunpack.c.l.b16 %v2025
        %v2084 = vunpack.c.l.b16 %v2026
        %v2085 = vunpack.c.l.b16 %v2027
        %v2086 = vpack.c.b16 %v2081, %v2080
        %v2087 = vpack.c.b16 %v2082, %v2082
        %v2088 = vpack.c.b16 %v2084, %v2083
        %v2089 = vpack.c.b16 %v2085, %v2085
        %2090 = vrot.lane.b32.xlu0 %v2086, 16
        %v2091 = vpop.permute.xlu0 %2090
        %2092 = vrot.lane.b32.xlu0 %v2087, 16
        %v2093 = vpop.permute.xlu0 %2092
        %2094 = vrot.lane.b32.xlu0 %v2088, 16
        %v2095 = vpop.permute.xlu0 %2094
        %2096 = vrot.lane.b32.xlu0 %v2089, 16
        %v2097 = vpop.permute.xlu0 %2096
        %v2104 = vunpack.c.l.b16 %v2028
        %v2105 = vunpack.c.l.b16 %v2029
        %v2106 = vunpack.c.l.b16 %v2030
        %v2107 = vunpack.c.l.b16 %v2031
        %v2108 = vunpack.c.l.b16 %v2032
        %v2109 = vunpack.c.l.b16 %v2033
        %v2110 = vpack.c.b16 %v2105, %v2104
        %v2111 = vpack.c.b16 %v2106, %v2106
        %v2112 = vpack.c.b16 %v2108, %v2107
        %v2113 = vpack.c.b16 %v2109, %v2109
        %2114 = vrot.lane.b32.xlu0 %v2110, 24
        %v2115 = vpop.permute.xlu0 %2114
        %2116 = vrot.lane.b32.xlu0 %v2111, 24
        %v2117 = vpop.permute.xlu0 %2116
        %2118 = vrot.lane.b32.xlu0 %v2112, 24
        %v2119 = vpop.permute.xlu0 %2118
        %2120 = vrot.lane.b32.xlu0 %v2113, 24
        %v2121 = vpop.permute.xlu0 %2120
        %v2124 = vsel %vm1186, %v2046, %v2067
        %v2127 = vsel %vm1186, %v2047, %v2069
        %v2130 = vsel %vm1186, %v2048, %v2071
        %v2133 = vsel %vm1186, %v2049, %v2073
        %vm2134 = vcmask 130048
        %v2136 = vsel %vm2134, %v2124, %v2091
        %v2138 = vsel %vm2134, %v2127, %v2093
        %v2140 = vsel %vm2134, %v2130, %v2095
        %v2142 = vsel %vm2134, %v2133, %v2097
        %vm2143 = vcmask 195584
        %v2145 = vsel %vm2143, %v2136, %v2115
        %v2147 = vsel %vm2143, %v2138, %v2117
        %v2149 = vsel %vm2143, %v2140, %v2119
        %v2151 = vsel %vm2143, %v2142, %v2121
        %v2152 = vld [vmem:[%s4] sm:$0xf]
        %v2153 = vld [vmem:[%s4 + $0x4] sm:$0xf]
        %v2154 = vld [vmem:[%s4 + $0x8] sm:$0xf]
        %v2155 = vld [vmem:[%s4 + $0xc] sm:$0xf]
        %v2160 = vunpack.c.l.b16 %v2152
        %v2161 = vunpack.c.l.b16 %v2153
        %v2162 = vunpack.c.l.b16 %v2154
        %v2163 = vunpack.c.l.b16 %v2155
        %v2164 = vpack.c.b16 %v2161, %v2160
        %v2165 = vpack.c.b16 %v2163, %v2162
        %v2168 = vsel %vm372, %v2145, 0
        %v2170 = vsel %vm372, %v2147, 0
        %2172 = vmatpush.bf16.msra.mxu0 0
        %2173 = vmatpush.bf16.msra.mxu0 0
        %2174 = vmatpush.bf16.msra.mxu0 0
        %2175 = vmatpush.bf16.msra.mxu0 0
        %2176 = vmatpush.bf16.msra.mxu0 0
        %2177 = vmatpush.bf16.msra.mxu0 0
        %2178 = vmatpush.bf16.msra.mxu0 %v2165
        %2179 = vmatpush.bf16.msra.mxu0 %v2164
        %2180 = vmatmul.bf16.gmra.mxu0 %v2168
        %v2181 = vpop.f32.mrf.mxu0
        %v2182 = vadd.f32 0.0, %v2181
        %v2183 = vpop.f32.mrf.mxu0
        %v2184 = vadd.f32 0.0, %v2183
        %2185 = vmatmul.bf16.gmra.mxu0 %v2170
        %v2186 = vpop.f32.mrf.mxu0
        %v2187 = vadd.f32 0.0, %v2186
        %v2188 = vpop.f32.mrf.mxu0
        %2189 = vdwg.mxu0
        %v2190 = vsel %vm372, %v2149, 0
        %v2192 = vsel %vm372, %v2151, 0
        %2194 = vmatpush.bf16.msra.mxu0 0
        %2195 = vmatpush.bf16.msra.mxu0 0
        %2196 = vmatpush.bf16.msra.mxu0 0
        %2197 = vmatpush.bf16.msra.mxu0 0
        %2198 = vmatpush.bf16.msra.mxu0 0
        %2199 = vmatpush.bf16.msra.mxu0 0
        %2200 = vmatpush.bf16.msra.mxu0 %v2165
        %2201 = vmatpush.bf16.msra.mxu0 %v2164
        %2202 = vmatmul.bf16.gmra.mxu0 %v2190
        %v2203 = vpop.f32.mrf.mxu0
        %v2204 = vadd.f32 0.0, %v2203
        %v2205 = vpop.f32.mrf.mxu0
        %v2206 = vadd.f32 0.0, %v2205
        %2207 = vmatmul.bf16.gmra.mxu0 %v2192
        %v2208 = vpop.f32.mrf.mxu0
        %v2209 = vadd.f32 0.0, %v2208
        %v2210 = vpop.f32.mrf.mxu0
        %2211 = vdwg.mxu0
        %v2212 = vld [vmem:[%s5] sm:$0x1]
        %v2214 = vperm.slane %v2212, 0
        %v2216 = vadd.f32 %v2182, %v2214
        %v2217 = vadd.f32 %v2184, %v2214
        %v2218 = vadd.f32 %v2187, %v2214
        %v2219 = vadd.f32 %v2204, %v2214
        %v2220 = vadd.f32 %v2206, %v2214
        %v2221 = vadd.f32 %v2209, %v2214
        %2222 = vst.msk [vmem:[%s350] sm:$0xff] %vm372, %v2216
        %2223 = vst.msk [vmem:[%s350 + $0x8] sm:$0xff] %vm372, %v2217
        %2224 = vst.msk [vmem:[%s350 + $0x10] sm:$0x1] %vm376, %v2218
        %2225 = vst.msk [vmem:[%s350 + $0x18] sm:$0xff] %vm372, %v2219
        %2226 = vst.msk [vmem:[%s350 + $0x20] sm:$0xff] %vm372, %v2220
        %2227 = vst.msk [vmem:[%s350 + $0x28] sm:$0x1] %vm376, %v2221
        %s2228 = smul.u32 2, %s24
        %p2229 = scmp.lt.s32.totalorder %s2228, 3
        %s2230 = scalar_select %p2229, %s2228, 3
        %s2231 = smul.addr %s2230, 3
        %s2232 = smul.addr %s2231, 8
        %s2233 = scalar_lea.vmem %s8, %s2232
        %s2234 = sand.u32 %s231, 1
        %s2235 = scalar_lea.sflag [#allocation3], %s2234
        %s2236 = sand.u32 %s231, 1
        %s2237 = smul.addr %s2236, 4
        %s2238 = scalar_lea.vmem [#allocation2], %s2237
        // Predicated region
        $region53: #{tpu_custom_call.1} parent=51 // pred_check
          %p2239 = pneg %p215
        $region54: #{tpu_custom_call.1} parent=51 // pred_check_branch
          %2241 = sbr.rel (%p2239) target = $region56
        $region55: #{tpu_custom_call.1} parent=51 // pred_region
          %s2242 = smul.u32 2, %s24
        $region56: #{tpu_custom_call.1} parent=51 // pred_fallthru
          _
        // Predicated region
        $region57: #{tpu_custom_call.1} parent=51 // pred_check
          %p2243 = pneg %p241
        $region58: #{tpu_custom_call.1} parent=51 // pred_check_branch
          %2245 = sbr.rel (%p2243) target = $region60
        $region59: #{tpu_custom_call.1} parent=51 // pred_region
          %s2246 = smul.u32 2, %s24
          %2248 = vsyncadd %s2235, 0
          %s2249 = smul.addr %s2246, 2
          %s2250 = scalar_lea.hbm %s9, %s2249
          %s2251 = sshll.u32 %s2238, 4
          %s2252 = int_to_ptr.vmem [resolvable:$true] %s2251
          %s2253 = sshll.u32 %s2250, 4
          %s2254 = int_to_ptr.hbm [resolvable:$true] %s2253
          %2259 = dma.vmem_to_hbm [thread:$0]  %s2252, 64, %s2254, %s2235, 32, 32, 2
        $region60: #{tpu_custom_call.1} parent=51 // pred_fallthru
          _
      $region52: #{tpu_custom_call.1} parent=5 // pred_fallthru
        _
      %p2260 = scmp.le.s32.totalorder 2, %s19
      // Predicated region
      $region61: #{tpu_custom_call.1} parent=5 // pred_check
        %p2261 = pneg %p2260
      $region62: #{tpu_custom_call.1} parent=5 // pred_check_branch
        %2263 = sbr.rel (%p2261) target = $region64
      $region63: #{tpu_custom_call.1} parent=5 // pred_region
        %s2264 = ssub.s32 %s19, 2
        // Predicated region
        $region65: #{tpu_custom_call.1} parent=63 // pred_check
          %p2265 = pneg %p221
        $region66: #{tpu_custom_call.1} parent=63 // pred_check_branch
          %2267 = sbr.rel (%p2265) target = $region68
        $region67: #{tpu_custom_call.1} parent=63 // pred_region
          %s2268 = smul.u32 2, %s25
          %p2269 = scmp.lt.s32.totalorder %s2268, 3
          %s2270 = scalar_select %p2269, %s2268, 3
          %s2271 = smul.addr %s2270, 3
          %s2272 = smul.addr %s2271, 8
          %s2273 = scalar_lea.vmem %s8, %s2272
        $region68: #{tpu_custom_call.1} parent=63 // pred_fallthru
          _
        // Predicated region
        $region69: #{tpu_custom_call.1} parent=63 // pred_check
          %p2274 = pneg %p247
        $region70: #{tpu_custom_call.1} parent=63 // pred_check_branch
          %2276 = sbr.rel (%p2274) target = $region72
        $region71: #{tpu_custom_call.1} parent=63 // pred_region
          %s2277 = sand.u32 %s232, 1
          %s2278 = scalar_lea.sflag [#allocation3], %s2277
          %s2279 = sand.u32 %s232, 1
          %s2280 = smul.addr %s2279, 4
          %s2281 = scalar_lea.vmem [#allocation2], %s2280
          %2283 = dma.done %s2278, 64
        $region72: #{tpu_custom_call.1} parent=63 // pred_fallthru
          _
      $region64: #{tpu_custom_call.1} parent=5 // pred_fallthru
        _
    $region6: #{tpu_custom_call.1} parent=1 // loop_footer
      %s23 = sadd.s32 1, %s19
    $region7: #{tpu_custom_call.1} parent=1 // loop_footer_branch
      %18 = sbr.rel target = $region3
    $region8: #{tpu_custom_call.1} parent=1 // loop_exit
      _
    %2284 = vsyncpa [#allocation3], 1
    %s2285 = scalar_lea.sflag [#allocation3], 1
    %2286 = vsyncpa %s2285, 1

</llo_original>
